<compile_context>
chip_gen: v7x
topology: tpu7x:2x2x1
jax: 0.10.0
libtpu: 0.0.40
codegen_flags: <defaults>
</compile_context>

<pallas_src>
import functools

import jax
import jax.numpy as jnp
from jax import lax
from jax.experimental import pallas as pl
from jax.experimental.pallas import tpu as pltpu


def _res2_psa_kernel(x_ref, wpack_ref, w1_ref, b1_ref, w2_ref, b2_ref,
                     gamma_ref, beta_ref, p_ref, e_ref, s_ref, mask_ref,
                     out_ref, sp_ref, col_ref, *,
                     width, B, dilation, eps):
    i = pl.program_id(0)
    f32 = jnp.float32
    BT = sp_ref.shape[1]          # B * Tp (lane axis, multiple of 128)

    # ---- residual accumulation of the channel split: sp = spx[0] + .. + spx[i]
    @pl.when(i == 0)
    def _():
        sp_ref[...] = x_ref[...]

    @pl.when(i > 0)
    def _():
        sp_ref[...] = sp_ref[...] + x_ref[...]

    sp = sp_ref[...]

    # ---- im2col: 7 dilated taps of the fused "same"-padded k=7 conv ----------
    # tap j, column c  <-  sp[:, c + (j-3)*dilation]  (zero outside each batch;
    # the slab carries a >=3*dilation zero gap between batches, so only the
    # slab-end fills below are needed).
    for j in range(7):
        s = (j - 3) * dilation
        r0 = j * width
        if s == 0:
            col_ref[r0:r0 + width, :] = sp
        elif s > 0:
            col_ref[r0:r0 + width, 0:BT - s] = sp[:, s:BT]
            col_ref[r0:r0 + width, BT - s:BT] = jnp.zeros((width, s), f32)
        else:
            u = -s
            col_ref[r0:r0 + width, 0:u] = jnp.zeros((width, u), f32)
            col_ref[r0:r0 + width, u:BT] = sp[:, 0:BT - u]

    # ---- PSA: the 4 dilated convs as one deep matmul -------------------------
    # packed weight rows are already in the reversed cat order [c4 | c3 | c2 | c1]
    feats = jnp.dot(wpack_ref[...], col_ref[...],
                    preferred_element_type=f32)                    # (width, B*Tp)

    # ---- SE (shared weights over the 4 kernel-size groups), block-diag form --
    m = jnp.dot(feats, p_ref[...], preferred_element_type=f32)     # per-batch means (width, B)
    h = jnp.dot(w1_ref[...], m, preferred_element_type=f32) + b1_ref[...]
    h = jnp.maximum(h, 0.0)                                        # (4*hid, B)
    logit = jnp.dot(w2_ref[...], h, preferred_element_type=f32) + b2_ref[...]
    sig = jax.nn.sigmoid(logit)                                    # (width, B)

    # softmax over the 4 groups (rows sharing the same within-group index)
    e = jnp.exp(sig)
    denom = jnp.dot(s_ref[...], e, preferred_element_type=f32)     # group sums
    att = e * pl.reciprocal(denom)                                 # (width, B)

    # broadcast per-batch attention across time (zero on pad columns) and apply
    att_full = jnp.dot(att, e_ref[...], preferred_element_type=f32)  # (width, B*Tp)
    r = jnp.maximum(feats * att_full, 0.0)                         # ReLU(PSA out)

    # ---- BatchNorm1d: training-mode stats over the B*T valid positions -------
    inv_b = 1.0 / B
    mean = jnp.sum(jnp.dot(r, p_ref[...], preferred_element_type=f32),
                   axis=1, keepdims=True) * inv_b                  # (width, 1)
    msq = jnp.sum(jnp.dot(r * r, p_ref[...], preferred_element_type=f32),
                  axis=1, keepdims=True) * inv_b
    var = jnp.maximum(msq - mean * mean, 0.0)
    bn_scale = lax.rsqrt(var + eps) * gamma_ref[...]
    bn_shift = beta_ref[...] - mean * bn_scale
    y = (r * bn_scale + bn_shift) * mask_ref[...]   # zero the pad columns so the
                                                    # carried sp stays zero-padded
    sp_ref[...] = y        # feeds the next res2 branch
    out_ref[...] = y


def _round_up(x, m):
    return ((x + m - 1) // m) * m


def res2conv1d_relu_bn(x, params, *, scale, dilation=1, eps=1e-5):
    """x: (B, C, T) float32 -> (B, C, T) float32."""
    B, C, T = x.shape
    assert C % scale == 0
    width = C // scale
    nums = scale if scale == 1 else scale - 1
    bc = width // 4
    hid = max(bc // 2, 1)

    # lane-dense slab layout: (channels, B*Tp); Tp a multiple of 128 with at
    # least 3*dilation zero columns separating consecutive batches.
    Tp = _round_up(T + 3 * dilation, 128)
    BT = B * Tp

    xs = jnp.transpose(x[:, :nums * width, :], (1, 0, 2))          # (nums*width, B, T)
    xs = jnp.pad(xs, ((0, 0), (0, 0), (0, Tp - T)))
    x_slab = xs.reshape(nums * width, BT).astype(jnp.float32)

    valid = (jnp.arange(Tp) < T).astype(jnp.float32)               # (Tp,)
    eye_b = jnp.eye(B, dtype=jnp.float32)
    E = (eye_b[:, :, None] * valid[None, None, :]).reshape(B, BT)  # (B, B*Tp) expand
    P = jnp.transpose(E) / float(T)                                # (B*Tp, B) avg-pool
    mask = jnp.tile(valid, (B,))[None, :]                          # (1, B*Tp)
    S = jnp.tile(jnp.eye(bc, dtype=jnp.float32), (4, 4))           # (width, width) group-sum

    kernel = functools.partial(
        _res2_psa_kernel, width=width, B=B, dilation=dilation, eps=eps)

    def full(a):
        return pl.BlockSpec(a.shape, lambda i, n=a.ndim: (0,) * n)

    def per_branch(a):
        return pl.BlockSpec((None,) + a.shape[1:],
                            lambda i, n=a.ndim: (i,) + (0,) * (n - 1))

    conv_flops = 2 * width * (7 * width) * BT
    se_flops = 2 * width * BT * B * 3 + 8 * (4 * hid) * width * B + 2 * width * width * B
    elem_flops = 12 * width * BT
    cost = pl.CostEstimate(
        flops=nums * (conv_flops + se_flops + elem_flops),
        transcendentals=nums * (3 * width * B + width),
        bytes_accessed=4 * (2 * nums * width * BT + BT * (2 * B + 1)
                            + nums * width * (7 * width + 8 * hid + 4)
                            + width * width),
    )

    out_slab = pl.pallas_call(
        kernel,
        out_shape=jax.ShapeDtypeStruct((nums * width, BT), jnp.float32),
        grid_spec=pltpu.PrefetchScalarGridSpec(
            num_scalar_prefetch=0,
            grid=(nums,),
            in_specs=[
                pl.BlockSpec((width, BT), lambda i: (i, 0)),       # x chunk i
                per_branch(params["wpack"]),
                per_branch(params["w1bd"]),
                per_branch(params["b1bd"]),
                per_branch(params["w2bd"]),
                per_branch(params["b2bd"]),
                per_branch(params["gamma"]),
                per_branch(params["beta"]),
                full(P), full(E), full(S), full(mask),
            ],
            out_specs=pl.BlockSpec((width, BT), lambda i: (i, 0)),
            scratch_shapes=[
                pltpu.VMEM((width, BT), jnp.float32),              # carried sp
                pltpu.VMEM((7 * width, BT), jnp.float32),          # im2col taps
            ],
        ),
        compiler_params=pltpu.CompilerParams(
            dimension_semantics=("arbitrary",),                    # serial sp carry
            vmem_limit_bytes=64 * 1024 * 1024,
        ),
        cost_estimate=cost,
    )(x_slab, params["wpack"], params["w1bd"], params["b1bd"],
      params["w2bd"], params["b2bd"], params["gamma"], params["beta"],
      P, E, S, mask)

    o = out_slab.reshape(nums * width, B, Tp)[:, :, :T]
    o = jnp.transpose(o, (1, 0, 2))                                # (B, nums*width, T)
    if scale != 1:                                                 # passthrough chunk
        o = jnp.concatenate([o, x[:, nums * width:, :]], axis=1)
    return o


def init_params(key, width, nums):
    """Deterministic synthetic parameters: packed kernel form + raw reference form."""
    bc = width // 4            # PSA split_channel
    hid = max(bc // 2, 1)      # SE reduction = 2
    ks = [1, 3, 5, 7]
    keys = jax.random.split(key, nums * 8)
    wpack, w1bd, b1bd, w2bd, b2bd = [], [], [], [], []
    raw = dict(convs=[], fc1_w=[], fc1_b=[], fc2_w=[], fc2_b=[])
    eye4 = jnp.eye(4, dtype=jnp.float32)
    idx = 0
    for _ in range(nums):
        packed = jnp.zeros((width, 7 * width), jnp.float32)
        branch_w = []
        for gi, k in enumerate(ks):
            w = jax.random.normal(keys[idx], (bc, width, k), jnp.float32) * 0.1
            idx += 1
            branch_w.append(w)
            # final output channel order is the reversed cat: [conv4|conv3|conv2|conv1]
            r0 = (3 - gi) * bc
            for p in range(k):
                j = p + 3 - k // 2            # tap index for spatial offset (j-3)*dil
                packed = packed.at[r0:r0 + bc, j * width:(j + 1) * width].set(w[:, :, p])
        raw["convs"].append(branch_w)
        wpack.append(packed)
        fc1_w = jax.random.normal(keys[idx], (hid, bc), jnp.float32) * 0.3; idx += 1
        fc1_b = jax.random.normal(keys[idx], (hid,), jnp.float32) * 0.1;    idx += 1
        fc2_w = jax.random.normal(keys[idx], (bc, hid), jnp.float32) * 0.3; idx += 1
        fc2_b = jax.random.normal(keys[idx], (bc,), jnp.float32) * 0.1;     idx += 1
        raw["fc1_w"].append(fc1_w); raw["fc1_b"].append(fc1_b)
        raw["fc2_w"].append(fc2_w); raw["fc2_b"].append(fc2_b)
        # shared SE weights applied independently to the 4 groups -> block-diagonal
        w1bd.append(jnp.kron(eye4, fc1_w))               # (4*hid, width)
        b1bd.append(jnp.tile(fc1_b, 4)[:, None])         # (4*hid, 1)
        w2bd.append(jnp.kron(eye4, fc2_w))               # (width, 4*hid)
        b2bd.append(jnp.tile(fc2_b, 4)[:, None])         # (width, 1)
    gamma = jnp.ones((nums, width, 1), jnp.float32)      # BatchNorm1d default init
    beta = jnp.zeros((nums, width, 1), jnp.float32)
    params = dict(wpack=jnp.stack(wpack), w1bd=jnp.stack(w1bd), b1bd=jnp.stack(b1bd),
                  w2bd=jnp.stack(w2bd), b2bd=jnp.stack(b2bd), gamma=gamma, beta=beta)
    raw["gamma"] = gamma
    raw["beta"] = beta
    return params, raw


def reference(x, raw, *, scale, dilation=1, eps=1e-5):
    """Pure-JAX reference (independent conv path via lax.conv_general_dilated)."""
    B, C, T = x.shape
    width = C // scale
    nums = scale if scale == 1 else scale - 1
    ks = [1, 3, 5, 7]
    outs = []
    sp = None
    for i in range(nums):
        spx_i = x[:, i * width:(i + 1) * width, :]
        sp = spx_i if i == 0 else sp + spx_i
        branch = []
        for gi, k in enumerate(ks):
            w = raw["convs"][i][gi]
            pad = (k // 2) * dilation
            yb = lax.conv_general_dilated(
                sp, w, window_strides=(1,), padding=[(pad, pad)],
                rhs_dilation=(dilation,),
                dimension_numbers=("NCH", "OIH", "NCH"))
            branch.append(yb)
        feats = jnp.stack(branch, axis=1)                          # (B,4,bc,T)
        w1 = raw["fc1_w"][i]; b1 = raw["fc1_b"][i]
        w2 = raw["fc2_w"][i]; b2 = raw["fc2_b"][i]
        m = feats.mean(axis=-1)                                    # (B,4,bc)
        h = jnp.maximum(jnp.einsum("bgc,hc->bgh", m, w1) + b1, 0.0)
        s = jax.nn.sigmoid(jnp.einsum("bgh,ch->bgc", h, w2) + b2)
        att = jax.nn.softmax(s, axis=1)[..., None]
        fw = feats * att
        psa = jnp.concatenate([fw[:, g] for g in (3, 2, 1, 0)], axis=1)
        r = jnp.maximum(psa, 0.0)
        mean = r.mean(axis=(0, 2), keepdims=True)
        var = ((r - mean) ** 2).mean(axis=(0, 2), keepdims=True)
        y = (r - mean) / jnp.sqrt(var + eps)
        y = y * raw["gamma"][i][None] + raw["beta"][i][None]
        outs.append(y)
        sp = y
    if scale != 1:
        outs.append(x[:, nums * width:, :])
    return jnp.concatenate(outs, axis=1)


if __name__ == "__main__":
    B, C, T = 2, 64, 100      # channels=64, scale=8 -> width=8, PSA split=2, SE hidden=1
    scale, dilation = 8, 1
    width = C // scale
    nums = scale - 1

    key = jax.random.PRNGKey(0)
    kx, kp = jax.random.split(key)
    x = jax.random.normal(kx, (B, C, T), jnp.float32)
    params, raw = init_params(kp, width, nums)

    out = res2conv1d_relu_bn(x, params, scale=scale, dilation=dilation)
    out = jax.block_until_ready(out)
    assert out.shape == (B, C, T)

    ref = reference(x, raw, scale=scale, dilation=dilation)
    err = float(jnp.max(jnp.abs(out - ref)))
    assert err < 1e-3, f"max abs err {err}"
    print("KERNEL_OK")
</pallas_src>

<mosaic_0001>
module attributes {stable_mosaic.version = 11 : i64} {
  func.func @_res2_psa_kernel(%arg0: i32, %arg1: memref<8x256xf32, #tpu.memory_space<vmem>>, %arg2: memref<1x8x56xf32, #tpu.memory_space<vmem>>, %arg3: memref<1x4x8xf32, #tpu.memory_space<vmem>>, %arg4: memref<1x4x1xf32, #tpu.memory_space<vmem>>, %arg5: memref<1x8x4xf32, #tpu.memory_space<vmem>>, %arg6: memref<1x8x1xf32, #tpu.memory_space<vmem>>, %arg7: memref<1x8x1xf32, #tpu.memory_space<vmem>>, %arg8: memref<1x8x1xf32, #tpu.memory_space<vmem>>, %arg9: memref<256x2xf32, #tpu.memory_space<vmem>>, %arg10: memref<2x256xf32, #tpu.memory_space<vmem>>, %arg11: memref<8x8xf32, #tpu.memory_space<vmem>>, %arg12: memref<1x256xf32, #tpu.memory_space<vmem>>, %arg13: memref<8x256xf32, #tpu.memory_space<vmem>>, %arg14: memref<8x256xf32, #tpu.memory_space<vmem>>, %arg15: memref<56x256xf32, #tpu.memory_space<vmem>>) attributes {dimension_semantics = [#tpu.dimension_semantics<arbitrary>], iteration_bounds = array<i64: 7>, scalar_prefetch = 0 : i64, scratch_operands = 2 : i64, tpu.core_type = #tpu.core_type<tc>, window_params = [{transform_indices = @transform_0, window_bounds = array<i64: 8, 256>}, {transform_indices = @transform_1, window_bounds = array<i64: 1, 8, 56>}, {transform_indices = @transform_2, window_bounds = array<i64: 1, 4, 8>}, {transform_indices = @transform_3, window_bounds = array<i64: 1, 4, 1>}, {transform_indices = @transform_4, window_bounds = array<i64: 1, 8, 4>}, {transform_indices = @transform_5, window_bounds = array<i64: 1, 8, 1>}, {transform_indices = @transform_6, window_bounds = array<i64: 1, 8, 1>}, {transform_indices = @transform_7, window_bounds = array<i64: 1, 8, 1>}, {pipeline_mode = #tpu.pipeline_mode<synchronous>, transform_indices = @transform_8, window_bounds = array<i64: 256, 2>}, {pipeline_mode = #tpu.pipeline_mode<synchronous>, transform_indices = @transform_9, window_bounds = array<i64: 2, 256>}, {pipeline_mode = #tpu.pipeline_mode<synchronous>, transform_indices = @transform_10, window_bounds = array<i64: 8, 8>}, {pipeline_mode = #tpu.pipeline_mode<synchronous>, transform_indices = @transform_11, window_bounds = array<i64: 1, 256>}, {transform_indices = @transform_12, window_bounds = array<i64: 8, 256>}]} {
    %c0_i32 = arith.constant 0 : i32
    %0 = arith.cmpi eq, %arg0, %c0_i32 : i32
    %1 = arith.extui %0 : i1 to i32
    %c0_i32_0 = arith.constant 0 : i32
    %2 = arith.cmpi ne, %1, %c0_i32_0 : i32
    scf.if %2 {
      %c0_79 = arith.constant 0 : index
      %c0_80 = arith.constant 0 : index
      %105 = vector.load %arg1[%c0_79, %c0_80] : memref<8x256xf32, #tpu.memory_space<vmem>>, vector<8x256xf32>
      %c0_81 = arith.constant 0 : index
      %c0_82 = arith.constant 0 : index
      %106 = vector.load %arg14[%c0_81, %c0_82] : memref<8x256xf32, #tpu.memory_space<vmem>>, vector<8x256xf32>
      tpu.vector_store %arg14[%c0_81, %c0_82], %105 {strides = array<i32>} : memref<8x256xf32, #tpu.memory_space<vmem>>, vector<8x256xf32>,
    } else {
    }
    %c0_i32_1 = arith.constant 0 : i32
    %3 = arith.cmpi sgt, %arg0, %c0_i32_1 : i32
    %4 = arith.extui %3 : i1 to i32
    %c0_i32_2 = arith.constant 0 : i32
    %5 = arith.cmpi ne, %4, %c0_i32_2 : i32
    scf.if %5 {
      %c0_79 = arith.constant 0 : index
      %c0_80 = arith.constant 0 : index
      %105 = vector.load %arg14[%c0_79, %c0_80] : memref<8x256xf32, #tpu.memory_space<vmem>>, vector<8x256xf32>
      %c0_81 = arith.constant 0 : index
      %c0_82 = arith.constant 0 : index
      %106 = vector.load %arg1[%c0_81, %c0_82] : memref<8x256xf32, #tpu.memory_space<vmem>>, vector<8x256xf32>
      %107 = arith.addf %105, %106 : vector<8x256xf32>
      %c0_83 = arith.constant 0 : index
      %c0_84 = arith.constant 0 : index
      %108 = vector.load %arg14[%c0_83, %c0_84] : memref<8x256xf32, #tpu.memory_space<vmem>>, vector<8x256xf32>
      tpu.vector_store %arg14[%c0_83, %c0_84], %107 {strides = array<i32>} : memref<8x256xf32, #tpu.memory_space<vmem>>, vector<8x256xf32>,
    } else {
    }
    %c0 = arith.constant 0 : index
    %c0_3 = arith.constant 0 : index
    %6 = vector.load %arg14[%c0, %c0_3] : memref<8x256xf32, #tpu.memory_space<vmem>>, vector<8x256xf32>
    %cst = arith.constant 0.000000e+00 : f32
    %7 = vector.broadcast %cst : f32 to vector<8x3xf32>
    %c0_4 = arith.constant 0 : index
    %c0_5 = arith.constant 0 : index
    %8 = vector.load %arg15[%c0_4, %c0_5] : memref<56x256xf32, #tpu.memory_space<vmem>>, vector<8x3xf32>
    tpu.vector_store %arg15[%c0_4, %c0_5], %7 {strides = array<i32>} : memref<56x256xf32, #tpu.memory_space<vmem>>, vector<8x3xf32>,
    %9 = vector.extract_strided_slice %6 {offsets = [0, 0], sizes = [8, 253], strides = [1, 1]} : vector<8x256xf32> to vector<8x253xf32>
    %c0_6 = arith.constant 0 : index
    %c3 = arith.constant 3 : index
    %10 = vector.load %arg15[%c0_6, %c3] : memref<56x256xf32, #tpu.memory_space<vmem>>, vector<8x253xf32>
    tpu.vector_store %arg15[%c0_6, %c3], %9 {strides = array<i32>} : memref<56x256xf32, #tpu.memory_space<vmem>>, vector<8x253xf32>,
    %cst_7 = arith.constant 0.000000e+00 : f32
    %11 = vector.broadcast %cst_7 : f32 to vector<8x2xf32>
    %c8 = arith.constant 8 : index
    %c0_8 = arith.constant 0 : index
    %12 = vector.load %arg15[%c8, %c0_8] : memref<56x256xf32, #tpu.memory_space<vmem>>, vector<8x2xf32>
    tpu.vector_store %arg15[%c8, %c0_8], %11 {strides = array<i32>} : memref<56x256xf32, #tpu.memory_space<vmem>>, vector<8x2xf32>,
    %13 = vector.extract_strided_slice %6 {offsets = [0, 0], sizes = [8, 254], strides = [1, 1]} : vector<8x256xf32> to vector<8x254xf32>
    %c8_9 = arith.constant 8 : index
    %c2 = arith.constant 2 : index
    %14 = vector.load %arg15[%c8_9, %c2] : memref<56x256xf32, #tpu.memory_space<vmem>>, vector<8x254xf32>
    tpu.vector_store %arg15[%c8_9, %c2], %13 {strides = array<i32>} : memref<56x256xf32, #tpu.memory_space<vmem>>, vector<8x254xf32>,
    %cst_10 = arith.constant 0.000000e+00 : f32
    %15 = vector.broadcast %cst_10 : f32 to vector<8x1xf32>
    %c16 = arith.constant 16 : index
    %c0_11 = arith.constant 0 : index
    %16 = vector.load %arg15[%c16, %c0_11] : memref<56x256xf32, #tpu.memory_space<vmem>>, vector<8x1xf32>
    tpu.vector_store %arg15[%c16, %c0_11], %15 {strides = array<i32>} : memref<56x256xf32, #tpu.memory_space<vmem>>, vector<8x1xf32>,
    %17 = vector.extract_strided_slice %6 {offsets = [0, 0], sizes = [8, 255], strides = [1, 1]} : vector<8x256xf32> to vector<8x255xf32>
    %c16_12 = arith.constant 16 : index
    %c1 = arith.constant 1 : index
    %18 = vector.load %arg15[%c16_12, %c1] : memref<56x256xf32, #tpu.memory_space<vmem>>, vector<8x255xf32>
    tpu.vector_store %arg15[%c16_12, %c1], %17 {strides = array<i32>} : memref<56x256xf32, #tpu.memory_space<vmem>>, vector<8x255xf32>,
    %c24 = arith.constant 24 : index
    %c0_13 = arith.constant 0 : index
    %19 = vector.load %arg15[%c24, %c0_13] : memref<56x256xf32, #tpu.memory_space<vmem>>, vector<8x256xf32>
    tpu.vector_store %arg15[%c24, %c0_13], %6 {strides = array<i32>} : memref<56x256xf32, #tpu.memory_space<vmem>>, vector<8x256xf32>,
    %20 = vector.extract_strided_slice %6 {offsets = [0, 1], sizes = [8, 255], strides = [1, 1]} : vector<8x256xf32> to vector<8x255xf32>
    %c32 = arith.constant 32 : index
    %c0_14 = arith.constant 0 : index
    %21 = vector.load %arg15[%c32, %c0_14] : memref<56x256xf32, #tpu.memory_space<vmem>>, vector<8x255xf32>
    tpu.vector_store %arg15[%c32, %c0_14], %20 {strides = array<i32>} : memref<56x256xf32, #tpu.memory_space<vmem>>, vector<8x255xf32>,
    %cst_15 = arith.constant 0.000000e+00 : f32
    %22 = vector.broadcast %cst_15 : f32 to vector<8x1xf32>
    %c32_16 = arith.constant 32 : index
    %c255 = arith.constant 255 : index
    %23 = vector.load %arg15[%c32_16, %c255] : memref<56x256xf32, #tpu.memory_space<vmem>>, vector<8x1xf32>
    tpu.vector_store %arg15[%c32_16, %c255], %22 {strides = array<i32>} : memref<56x256xf32, #tpu.memory_space<vmem>>, vector<8x1xf32>,
    %24 = vector.extract_strided_slice %6 {offsets = [0, 2], sizes = [8, 254], strides = [1, 1]} : vector<8x256xf32> to vector<8x254xf32>
    %c40 = arith.constant 40 : index
    %c0_17 = arith.constant 0 : index
    %25 = vector.load %arg15[%c40, %c0_17] : memref<56x256xf32, #tpu.memory_space<vmem>>, vector<8x254xf32>
    tpu.vector_store %arg15[%c40, %c0_17], %24 {strides = array<i32>} : memref<56x256xf32, #tpu.memory_space<vmem>>, vector<8x254xf32>,
    %cst_18 = arith.constant 0.000000e+00 : f32
    %26 = vector.broadcast %cst_18 : f32 to vector<8x2xf32>
    %c40_19 = arith.constant 40 : index
    %c254 = arith.constant 254 : index
    %27 = vector.load %arg15[%c40_19, %c254] : memref<56x256xf32, #tpu.memory_space<vmem>>, vector<8x2xf32>
    tpu.vector_store %arg15[%c40_19, %c254], %26 {strides = array<i32>} : memref<56x256xf32, #tpu.memory_space<vmem>>, vector<8x2xf32>,
    %28 = vector.extract_strided_slice %6 {offsets = [0, 3], sizes = [8, 253], strides = [1, 1]} : vector<8x256xf32> to vector<8x253xf32>
    %c48 = arith.constant 48 : index
    %c0_20 = arith.constant 0 : index
    %29 = vector.load %arg15[%c48, %c0_20] : memref<56x256xf32, #tpu.memory_space<vmem>>, vector<8x253xf32>
    tpu.vector_store %arg15[%c48, %c0_20], %28 {strides = array<i32>} : memref<56x256xf32, #tpu.memory_space<vmem>>, vector<8x253xf32>,
    %cst_21 = arith.constant 0.000000e+00 : f32
    %30 = vector.broadcast %cst_21 : f32 to vector<8x3xf32>
    %c48_22 = arith.constant 48 : index
    %c253 = arith.constant 253 : index
    %31 = vector.load %arg15[%c48_22, %c253] : memref<56x256xf32, #tpu.memory_space<vmem>>, vector<8x3xf32>
    tpu.vector_store %arg15[%c48_22, %c253], %30 {strides = array<i32>} : memref<56x256xf32, #tpu.memory_space<vmem>>, vector<8x3xf32>,
    %c0_23 = arith.constant 0 : index
    %c0_24 = arith.constant 0 : index
    %c0_25 = arith.constant 0 : index
    %32 = vector.load %arg2[%c0_23, %c0_24, %c0_25] : memref<1x8x56xf32, #tpu.memory_space<vmem>>, vector<1x8x56xf32>
    %33 = vector.shape_cast %32 : vector<1x8x56xf32> to vector<8x56xf32>
    %c0_26 = arith.constant 0 : index
    %c0_27 = arith.constant 0 : index
    %34 = vector.load %arg15[%c0_26, %c0_27] : memref<56x256xf32, #tpu.memory_space<vmem>>, vector<56x256xf32>
    %cst_28 = arith.constant dense<0.000000e+00> : vector<8x256xf32>
    %35 = tpu.matmul %33, %34, %cst_28 {dimension_numbers = #tpu.dot_dimension_numbers<[1], [0], [0], [1], [0, 0, 1, 1], [], []>} : vector<8x56xf32>, vector<56x256xf32>, vector<8x256xf32> -> vector<8x256xf32>
    %c0_29 = arith.constant 0 : index
    %c0_30 = arith.constant 0 : index
    %36 = vector.load %arg9[%c0_29, %c0_30] : memref<256x2xf32, #tpu.memory_space<vmem>>, vector<256x2xf32>
    %cst_31 = arith.constant dense<0.000000e+00> : vector<8x2xf32>
    %37 = tpu.matmul %35, %36, %cst_31 {dimension_numbers = #tpu.dot_dimension_numbers<[1], [0], [0], [1], [0, 0, 1, 1], [], []>} : vector<8x256xf32>, vector<256x2xf32>, vector<8x2xf32> -> vector<8x2xf32>
    %c0_32 = arith.constant 0 : index
    %c0_33 = arith.constant 0 : index
    %c0_34 = arith.constant 0 : index
    %38 = vector.load %arg3[%c0_32, %c0_33, %c0_34] : memref<1x4x8xf32, #tpu.memory_space<vmem>>, vector<1x4x8xf32>
    %39 = vector.shape_cast %38 : vector<1x4x8xf32> to vector<4x8xf32>
    %cst_35 = arith.constant dense<0.000000e+00> : vector<4x2xf32>
    %40 = tpu.matmul %39, %37, %cst_35 {dimension_numbers = #tpu.dot_dimension_numbers<[1], [0], [0], [1], [0, 0, 1, 1], [], []>} : vector<4x8xf32>, vector<8x2xf32>, vector<4x2xf32> -> vector<4x2xf32>
    %c0_36 = arith.constant 0 : index
    %c0_37 = arith.constant 0 : index
    %c0_38 = arith.constant 0 : index
    %41 = vector.load %arg4[%c0_36, %c0_37, %c0_38] : memref<1x4x1xf32, #tpu.memory_space<vmem>>, vector<1x4x1xf32>
    %42 = vector.shape_cast %41 : vector<1x4x1xf32> to vector<4x1xf32>
    %43 = vector.broadcast %42 : vector<4x1xf32> to vector<4x2xf32>
    %44 = arith.addf %40, %43 : vector<4x2xf32>
    %cst_39 = arith.constant 0.000000e+00 : f32
    %45 = vector.broadcast %cst_39 : f32 to vector<4x2xf32>
    %46 = arith.maximumf %44, %45 : vector<4x2xf32>
    %c0_40 = arith.constant 0 : index
    %c0_41 = arith.constant 0 : index
    %c0_42 = arith.constant 0 : index
    %47 = vector.load %arg5[%c0_40, %c0_41, %c0_42] : memref<1x8x4xf32, #tpu.memory_space<vmem>>, vector<1x8x4xf32>
    %48 = vector.shape_cast %47 : vector<1x8x4xf32> to vector<8x4xf32>
    %cst_43 = arith.constant dense<0.000000e+00> : vector<8x2xf32>
    %49 = tpu.matmul %48, %46, %cst_43 {dimension_numbers = #tpu.dot_dimension_numbers<[1], [0], [0], [1], [0, 0, 1, 1], [], []>} : vector<8x4xf32>, vector<4x2xf32>, vector<8x2xf32> -> vector<8x2xf32>
    %c0_44 = arith.constant 0 : index
    %c0_45 = arith.constant 0 : index
    %c0_46 = arith.constant 0 : index
    %50 = vector.load %arg6[%c0_44, %c0_45, %c0_46] : memref<1x8x1xf32, #tpu.memory_space<vmem>>, vector<1x8x1xf32>
    %51 = vector.shape_cast %50 : vector<1x8x1xf32> to vector<8x1xf32>
    %52 = vector.broadcast %51 : vector<8x1xf32> to vector<8x2xf32>
    %53 = arith.addf %49, %52 : vector<8x2xf32>
    %54 = arith.negf %53 : vector<8x2xf32>
    %55 = math.exp %54 : vector<8x2xf32>
    %cst_47 = arith.constant 1.000000e+00 : f32
    %56 = vector.broadcast %cst_47 : f32 to vector<8x2xf32>
    %57 = arith.addf %56, %55 : vector<8x2xf32>
    %58 = arith.divf %56, %57 : vector<8x2xf32>
    %59 = math.exp %58 : vector<8x2xf32>
    %c0_48 = arith.constant 0 : index
    %c0_49 = arith.constant 0 : index
    %60 = vector.load %arg11[%c0_48, %c0_49] : memref<8x8xf32, #tpu.memory_space<vmem>>, vector<8x8xf32>
    %cst_50 = arith.constant dense<0.000000e+00> : vector<8x2xf32>
    %61 = tpu.matmul %60, %59, %cst_50 {dimension_numbers = #tpu.dot_dimension_numbers<[1], [0], [0], [1], [0, 0, 1, 1], [], []>} : vector<8x8xf32>, vector<8x2xf32>, vector<8x2xf32> -> vector<8x2xf32>
    %62 = tpu.reciprocal %61 : vector<8x2xf32> -> vector<8x2xf32>
    %63 = arith.mulf %59, %62 : vector<8x2xf32>
    %c0_51 = arith.constant 0 : index
    %c0_52 = arith.constant 0 : index
    %64 = vector.load %arg10[%c0_51, %c0_52] : memref<2x256xf32, #tpu.memory_space<vmem>>, vector<2x256xf32>
    %cst_53 = arith.constant dense<0.000000e+00> : vector<8x256xf32>
    %65 = tpu.matmul %63, %64, %cst_53 {dimension_numbers = #tpu.dot_dimension_numbers<[1], [0], [0], [1], [0, 0, 1, 1], [], []>} : vector<8x2xf32>, vector<2x256xf32>, vector<8x256xf32> -> vector<8x256xf32>
    %66 = arith.mulf %35, %65 : vector<8x256xf32>
    %cst_54 = arith.constant 0.000000e+00 : f32
    %67 = vector.broadcast %cst_54 : f32 to vector<8x256xf32>
    %68 = arith.maximumf %66, %67 : vector<8x256xf32>
    %c0_55 = arith.constant 0 : index
    %c0_56 = arith.constant 0 : index
    %69 = vector.load %arg9[%c0_55, %c0_56] : memref<256x2xf32, #tpu.memory_space<vmem>>, vector<256x2xf32>
    %cst_57 = arith.constant dense<0.000000e+00> : vector<8x2xf32>
    %70 = tpu.matmul %68, %69, %cst_57 {dimension_numbers = #tpu.dot_dimension_numbers<[1], [0], [0], [1], [0, 0, 1, 1], [], []>} : vector<8x256xf32>, vector<256x2xf32>, vector<8x2xf32> -> vector<8x2xf32>
    %cst_58 = arith.constant dense<0.000000e+00> : vector<8xf32>
    %71 = vector.multi_reduction <add>, %70, %cst_58 [1] : vector<8x2xf32> to vector<8xf32>
    %72 = vector.shape_cast %71 : vector<8xf32> to vector<8x1xf32>
    %cst_59 = arith.constant 5.000000e-01 : f32
    %73 = vector.broadcast %cst_59 : f32 to vector<8x1xf32>
    %74 = arith.mulf %72, %73 : vector<8x1xf32>
    %75 = arith.mulf %68, %68 : vector<8x256xf32>
    %c0_60 = arith.constant 0 : index
    %c0_61 = arith.constant 0 : index
    %76 = vector.load %arg9[%c0_60, %c0_61] : memref<256x2xf32, #tpu.memory_space<vmem>>, vector<256x2xf32>
    %cst_62 = arith.constant dense<0.000000e+00> : vector<8x2xf32>
    %77 = tpu.matmul %75, %76, %cst_62 {dimension_numbers = #tpu.dot_dimension_numbers<[1], [0], [0], [1], [0, 0, 1, 1], [], []>} : vector<8x256xf32>, vector<256x2xf32>, vector<8x2xf32> -> vector<8x2xf32>
    %cst_63 = arith.constant dense<0.000000e+00> : vector<8xf32>
    %78 = vector.multi_reduction <add>, %77, %cst_63 [1] : vector<8x2xf32> to vector<8xf32>
    %79 = vector.shape_cast %78 : vector<8xf32> to vector<8x1xf32>
    %cst_64 = arith.constant 5.000000e-01 : f32
    %80 = vector.broadcast %cst_64 : f32 to vector<8x1xf32>
    %81 = arith.mulf %79, %80 : vector<8x1xf32>
    %82 = arith.mulf %74, %74 : vector<8x1xf32>
    %83 = arith.subf %81, %82 : vector<8x1xf32>
    %cst_65 = arith.constant 0.000000e+00 : f32
    %84 = vector.broadcast %cst_65 : f32 to vector<8x1xf32>
    %85 = arith.maximumf %83, %84 : vector<8x1xf32>
    %cst_66 = arith.constant 9.99999974E-6 : f32
    %86 = vector.broadcast %cst_66 : f32 to vector<8x1xf32>
    %87 = arith.addf %85, %86 : vector<8x1xf32>
    %88 = math.rsqrt %87 : vector<8x1xf32>
    %c0_67 = arith.constant 0 : index
    %c0_68 = arith.constant 0 : index
    %c0_69 = arith.constant 0 : index
    %89 = vector.load %arg7[%c0_67, %c0_68, %c0_69] : memref<1x8x1xf32, #tpu.memory_space<vmem>>, vector<1x8x1xf32>
    %90 = vector.shape_cast %89 : vector<1x8x1xf32> to vector<8x1xf32>
    %91 = arith.mulf %88, %90 : vector<8x1xf32>
    %c0_70 = arith.constant 0 : index
    %c0_71 = arith.constant 0 : index
    %c0_72 = arith.constant 0 : index
    %92 = vector.load %arg8[%c0_70, %c0_71, %c0_72] : memref<1x8x1xf32, #tpu.memory_space<vmem>>, vector<1x8x1xf32>
    %93 = vector.shape_cast %92 : vector<1x8x1xf32> to vector<8x1xf32>
    %94 = arith.mulf %74, %91 : vector<8x1xf32>
    %95 = arith.subf %93, %94 : vector<8x1xf32>
    %96 = vector.broadcast %91 : vector<8x1xf32> to vector<8x256xf32>
    %97 = arith.mulf %68, %96 : vector<8x256xf32>
    %98 = vector.broadcast %95 : vector<8x1xf32> to vector<8x256xf32>
    %99 = arith.addf %97, %98 : vector<8x256xf32>
    %c0_73 = arith.constant 0 : index
    %c0_74 = arith.constant 0 : index
    %100 = vector.load %arg12[%c0_73, %c0_74] : memref<1x256xf32, #tpu.memory_space<vmem>>, vector<1x256xf32>
    %101 = vector.broadcast %100 : vector<1x256xf32> to vector<8x256xf32>
    %102 = arith.mulf %99, %101 : vector<8x256xf32>
    %c0_75 = arith.constant 0 : index
    %c0_76 = arith.constant 0 : index
    %103 = vector.load %arg14[%c0_75, %c0_76] : memref<8x256xf32, #tpu.memory_space<vmem>>, vector<8x256xf32>
    tpu.vector_store %arg14[%c0_75, %c0_76], %102 {strides = array<i32>} : memref<8x256xf32, #tpu.memory_space<vmem>>, vector<8x256xf32>,
    %c0_77 = arith.constant 0 : index
    %c0_78 = arith.constant 0 : index
    %104 = vector.load %arg13[%c0_77, %c0_78] : memref<8x256xf32, #tpu.memory_space<vmem>>, vector<8x256xf32>
    tpu.vector_store %arg13[%c0_77, %c0_78], %102 {strides = array<i32>} : memref<8x256xf32, #tpu.memory_space<vmem>>, vector<8x256xf32>,
    return
  }
  func.func @transform_0(%arg0: i32) -> (i32, i32) {
    %c0_i32 = arith.constant 0 : i32
    %c0_i32_0 = arith.constant 0 : i32
    return %arg0, %c0_i32 : i32, i32
  }
  func.func @transform_1(%arg0: i32) -> (i32, i32, i32) {
    %c0_i32 = arith.constant 0 : i32
    %c0_i32_0 = arith.constant 0 : i32
    %c0_i32_1 = arith.constant 0 : i32
    return %arg0, %c0_i32, %c0_i32_0 : i32, i32, i32
  }
  func.func @transform_2(%arg0: i32) -> (i32, i32, i32) {
    %c0_i32 = arith.constant 0 : i32
    %c0_i32_0 = arith.constant 0 : i32
    %c0_i32_1 = arith.constant 0 : i32
    return %arg0, %c0_i32, %c0_i32_0 : i32, i32, i32
  }
  func.func @transform_3(%arg0: i32) -> (i32, i32, i32) {
    %c0_i32 = arith.constant 0 : i32
    %c0_i32_0 = arith.constant 0 : i32
    %c0_i32_1 = arith.constant 0 : i32
    return %arg0, %c0_i32, %c0_i32_0 : i32, i32, i32
  }
  func.func @transform_4(%arg0: i32) -> (i32, i32, i32) {
    %c0_i32 = arith.constant 0 : i32
    %c0_i32_0 = arith.constant 0 : i32
    %c0_i32_1 = arith.constant 0 : i32
    return %arg0, %c0_i32, %c0_i32_0 : i32, i32, i32
  }
  func.func @transform_5(%arg0: i32) -> (i32, i32, i32) {
    %c0_i32 = arith.constant 0 : i32
    %c0_i32_0 = arith.constant 0 : i32
    %c0_i32_1 = arith.constant 0 : i32
    return %arg0, %c0_i32, %c0_i32_0 : i32, i32, i32
  }
  func.func @transform_6(%arg0: i32) -> (i32, i32, i32) {
    %c0_i32 = arith.constant 0 : i32
    %c0_i32_0 = arith.constant 0 : i32
    %c0_i32_1 = arith.constant 0 : i32
    return %arg0, %c0_i32, %c0_i32_0 : i32, i32, i32
  }
  func.func @transform_7(%arg0: i32) -> (i32, i32, i32) {
    %c0_i32 = arith.constant 0 : i32
    %c0_i32_0 = arith.constant 0 : i32
    %c0_i32_1 = arith.constant 0 : i32
    return %arg0, %c0_i32, %c0_i32_0 : i32, i32, i32
  }
  func.func @transform_8(%arg0: i32) -> (i32, i32) {
    %c0_i32 = arith.constant 0 : i32
    %c0_i32_0 = arith.constant 0 : i32
    %c0_i32_1 = arith.constant 0 : i32
    return %c0_i32, %c0_i32_0 : i32, i32
  }
  func.func @transform_9(%arg0: i32) -> (i32, i32) {
    %c0_i32 = arith.constant 0 : i32
    %c0_i32_0 = arith.constant 0 : i32
    %c0_i32_1 = arith.constant 0 : i32
    return %c0_i32, %c0_i32_0 : i32, i32
  }
  func.func @transform_10(%arg0: i32) -> (i32, i32) {
    %c0_i32 = arith.constant 0 : i32
    %c0_i32_0 = arith.constant 0 : i32
    %c0_i32_1 = arith.constant 0 : i32
    return %c0_i32, %c0_i32_0 : i32, i32
  }
  func.func @transform_11(%arg0: i32) -> (i32, i32) {
    %c0_i32 = arith.constant 0 : i32
    %c0_i32_0 = arith.constant 0 : i32
    %c0_i32_1 = arith.constant 0 : i32
    return %c0_i32, %c0_i32_0 : i32, i32
  }
  func.func @transform_12(%arg0: i32) -> (i32, i32) {
    %c0_i32 = arith.constant 0 : i32
    %c0_i32_0 = arith.constant 0 : i32
    return %arg0, %c0_i32 : i32, i32
  }
}

</mosaic_0001>

<llo_original>
// kernel: tpu_custom_call.1
$region0: #{tpu_custom_call.1}
  #allocation0 [shape = 'u32[]', space=smem, size = 0x4, offset = 0x4, fixed_abs, tag = 'smem constant byte address 0x4 - core index']
  #allocation1 [shape = 'u32[144,128]{1,0:T(1,128)}', space=vmem, size = 0x12000, scoped, tag = 'internal scratch']
  #allocation2 [shape = 'f32[8,256]{1,0:T(8,128)}', space=vmem, size = 0x2000, scoped, tag = 'scratch operand']
  #allocation3 [shape = 'f32[56,256]{1,0:T(8,128)}', space=vmem, size = 0xe000, scoped, tag = 'scratch operand']
  %s0 = inlined_call_operand.hbm [shape: f32[56,256], index: 0, kind: input, shape index: {}]
  %s1 = inlined_call_operand.hbm [shape: f32[7,8,56], index: 1, kind: input, shape index: {}]
  %s2 = inlined_call_operand.hbm [shape: f32[7,4,8], index: 2, kind: input, shape index: {}]
  %s3 = inlined_call_operand.hbm [shape: f32[7,4,1], index: 3, kind: input, shape index: {}]
  %s4 = inlined_call_operand.hbm [shape: f32[7,8,4], index: 4, kind: input, shape index: {}]
  %s5 = inlined_call_operand.hbm [shape: f32[7,8,1], index: 5, kind: input, shape index: {}]
  %s6 = inlined_call_operand.hbm [shape: f32[7,8,1], index: 6, kind: input, shape index: {}]
  %s7 = inlined_call_operand.hbm [shape: f32[7,8,1], index: 7, kind: input, shape index: {}]
  %s8 = inlined_call_operand.hbm [shape: f32[256,2], index: 8, kind: input, shape index: {}]
  %s9 = inlined_call_operand.hbm [shape: f32[2,256], index: 9, kind: input, shape index: {}]
  %s10 = inlined_call_operand.hbm [shape: f32[8,8], index: 10, kind: input, shape index: {}]
  %s11 = inlined_call_operand.hbm [shape: f32[1,256], index: 11, kind: input, shape index: {}]
  %s12 = inlined_call_operand.hbm [shape: f32[56,256], index: 12, kind: output, shape index: {}]
  %s13 = sld [smem:[#allocation0]]
  $region137: #{tpu_custom_call.1} parent=0
    _
  %s15 = ssub.s32 1, %s13
  %s16 = scalar_select 0, %s15, %s13
  $region1: #{tpu_custom_call.1} parent=0
    #allocation4 [shape = 'u8[16384]{0}', space=vmem, size = 0x4000, scoped, tag = 'input window, operand 0']
    #allocation5 [shape = 's32[2]{0}', space=sflag, size = 0x8, scoped, tag = 'scoped memory for tpu_custom_call.1']
    #allocation6 [shape = 's32[2]{0}', space=sflag, size = 0x8, scoped, tag = 'scoped memory for tpu_custom_call.1']
    #allocation7 [shape = 'u8[8192]{0}', space=vmem, size = 0x2000, scoped, tag = 'input window, operand 1']
    #allocation8 [shape = 's32[2]{0}', space=sflag, size = 0x8, scoped, tag = 'scoped memory for tpu_custom_call.1']
    #allocation9 [shape = 'u8[4096]{0}', space=vmem, size = 0x1000, scoped, tag = 'input window, operand 2']
    #allocation10 [shape = 'u8[4096]{0}', space=vmem, size = 0x1000, scoped, tag = 'input window, operand 3']
    #allocation11 [shape = 's32[2]{0}', space=sflag, size = 0x8, scoped, tag = 'scoped memory for tpu_custom_call.1']
    #allocation12 [shape = 'u8[8192]{0}', space=vmem, size = 0x2000, scoped, tag = 'input window, operand 4']
    #allocation13 [shape = 'u8[8192]{0}', space=vmem, size = 0x2000, scoped, tag = 'input window, operand 5']
    #allocation14 [shape = 's32[2]{0}', space=sflag, size = 0x8, scoped, tag = 'scoped memory for tpu_custom_call.1']
    #allocation15 [shape = 'u8[8192]{0}', space=vmem, size = 0x2000, scoped, tag = 'input window, operand 6']
    #allocation16 [shape = 'u8[8192]{0}', space=vmem, size = 0x2000, scoped, tag = 'input window, operand 7']
    #allocation17 [shape = 's32[2]{0}', space=sflag, size = 0x8, scoped, tag = 'scoped memory for tpu_custom_call.1']
    #allocation18 [shape = 'u8[131072]{0}', space=vmem, size = 0x20000, scoped, tag = 'input window, operand 8, single buffered']
    #allocation19 [shape = 'u8[2048]{0}', space=vmem, size = 0x800, scoped, tag = 'input window, operand 9, single buffered']
    #allocation20 [shape = 's32[1]{0}', space=sflag, size = 0x4, scoped, tag = 'scoped memory for tpu_custom_call.1']
    #allocation21 [shape = 'u8[4096]{0}', space=vmem, size = 0x1000, scoped, tag = 'input window, operand 10, single buffered']
    #allocation22 [shape = 'u8[1024]{0}', space=vmem, size = 0x400, scoped, tag = 'input window, operand 11, single buffered']
    #allocation23 [shape = 's32[1]{0}', space=sflag, size = 0x4, scoped, tag = 'scoped memory for tpu_custom_call.1']
    #allocation24 [shape = 'u8[16384]{0}', space=vmem, size = 0x4000, scoped, tag = 'output window, operand 0']
    %17 = vsyncpa [#allocation5], 0
    %s18 = scalar_lea.sflag [#allocation5], 1
    %19 = vsyncpa %s18, 0
    %20 = vsyncpa [#allocation8], 0
    %s21 = scalar_lea.sflag [#allocation8], 1
    %22 = vsyncpa %s21, 0
    %23 = vsyncpa [#allocation11], 0
    %s24 = scalar_lea.sflag [#allocation11], 1
    %25 = vsyncpa %s24, 0
    %26 = vsyncpa [#allocation14], 0
    %s27 = scalar_lea.sflag [#allocation14], 1
    %28 = vsyncpa %s27, 0
    %29 = vsyncpa [#allocation17], 0
    %s30 = scalar_lea.sflag [#allocation17], 1
    %31 = vsyncpa %s30, 0
    %32 = vsyncpa [#allocation20], 0
    %33 = vsyncpa [#allocation23], 0
    %34 = vsyncpa [#allocation6], 0
    %s35 = scalar_lea.sflag [#allocation6], 1
    %36 = vsyncpa %s35, 0
    loop: start=0, step=1, limit=9
    $region2: #{tpu_custom_call.1} parent=1 // loop_pre_header
      _
    $region3: #{tpu_custom_call.1} parent=1 // loop_header
      %s38 = sphi 0, %s42
      %p39 = scmp.ge.s32.totalorder %s38, 9
      %s48 = sphi 0, %s50
      %s51 = sphi 0, %s48
      %s52 = sphi 0, %s51
      %s68 = sphi 0, %s52
      %s74 = sphi 0, %s76
      %s77 = sphi 0, %s74
      %s78 = sphi 0, %s77
      %s94 = sphi 0, %s78
      %s100 = sphi 0, %s102
      %s103 = sphi 0, %s100
      %s104 = sphi 0, %s103
      %s120 = sphi 0, %s104
      %s126 = sphi 0, %s128
      %s129 = sphi 0, %s126
      %s130 = sphi 0, %s129
      %s146 = sphi 0, %s130
      %s152 = sphi 0, %s154
      %s155 = sphi 0, %s152
      %s156 = sphi 0, %s155
      %s172 = sphi 0, %s156
      %s178 = sphi 0, %s180
      %s181 = sphi 0, %s178
      %s182 = sphi 0, %s181
      %s198 = sphi 0, %s182
      %s204 = sphi 0, %s206
      %s207 = sphi 0, %s204
      %s208 = sphi 0, %s207
      %s224 = sphi 0, %s208
      %s230 = sphi 0, %s232
      %s233 = sphi 0, %s230
      %s234 = sphi 0, %s233
      %s250 = sphi 0, %s234
      %s254 = sphi 0, %s254
      %s256 = sphi 0, %s254
      %s257 = sphi 0, %s256
      %s271 = sphi 0, %s257
      %s275 = sphi 0, %s275
      %s277 = sphi 0, %s275
      %s278 = sphi 0, %s277
      %s292 = sphi 0, %s278
      %s296 = sphi 0, %s296
      %s298 = sphi 0, %s296
      %s299 = sphi 0, %s298
      %s313 = sphi 0, %s299
      %s317 = sphi 0, %s317
      %s319 = sphi 0, %s317
      %s320 = sphi 0, %s319
      %s334 = sphi 0, %s320
      %s340 = sphi 0, %s342
      %s343 = sphi 0, %s340
      %s344 = sphi 0, %s343
      %s360 = sphi 0, %s344
    $region4: #{tpu_custom_call.1} parent=1 // loop_header_branch
      %41 = sbr.rel (%p39) target = $region8
    $region5: #{tpu_custom_call.1} parent=1 // loop_body
      %s43 = ssub.s32 %s38, 1
      %s44 = ssub.s32 %s38, 2
      %s45 = sadd.s32 %s38, 1
      %s46 = ssub.s32 %s38, %s45
      %p47 = scmp.eq.s32.totalorder %s46, 0
      %s49 = sadd.s32 %s48, 1
      %s50 = scalar_select %p47, %s48, %s49
      %p53 = pneg %p47
      %p54 = scmp.eq.s32.totalorder %s38, 6
      %p55 = por %p53, %p54
      %p56 = scmp.ne.s32.totalorder %s48, %s51
      %p57 = scmp.eq.s32.totalorder %s38, 0
      %p58 = por %p56, %p57
      %p59 = scmp.ne.s32.totalorder %s48, %s51
      %p60 = scmp.eq.s32.totalorder %s43, 6
      %p61 = por %p59, %p60
      %p62 = scmp.ne.s32.totalorder %s51, %s52
      %p63 = scmp.eq.s32.totalorder %s43, 0
      %p64 = por %p62, %p63
      %p65 = scmp.ne.s32.totalorder %s51, %s52
      %p66 = scmp.eq.s32.totalorder %s44, 6
      %p67 = por %p65, %p66
      %p69 = scmp.ne.s32.totalorder %s52, %s68
      %p70 = scmp.eq.s32.totalorder %s44, 0
      %p71 = por %p69, %p70
      %s72 = ssub.s32 %s38, %s45
      %p73 = scmp.eq.s32.totalorder %s72, 0
      %s75 = sadd.s32 %s74, 1
      %s76 = scalar_select %p73, %s74, %s75
      %p79 = pneg %p73
      %p80 = scmp.eq.s32.totalorder %s38, 6
      %p81 = por %p79, %p80
      %p82 = scmp.ne.s32.totalorder %s74, %s77
      %p83 = scmp.eq.s32.totalorder %s38, 0
      %p84 = por %p82, %p83
      %p85 = scmp.ne.s32.totalorder %s74, %s77
      %p86 = scmp.eq.s32.totalorder %s43, 6
      %p87 = por %p85, %p86
      %p88 = scmp.ne.s32.totalorder %s77, %s78
      %p89 = scmp.eq.s32.totalorder %s43, 0
      %p90 = por %p88, %p89
      %p91 = scmp.ne.s32.totalorder %s77, %s78
      %p92 = scmp.eq.s32.totalorder %s44, 6
      %p93 = por %p91, %p92
      %p95 = scmp.ne.s32.totalorder %s78, %s94
      %p96 = scmp.eq.s32.totalorder %s44, 0
      %p97 = por %p95, %p96
      %s98 = ssub.s32 %s38, %s45
      %p99 = scmp.eq.s32.totalorder %s98, 0
      %s101 = sadd.s32 %s100, 1
      %s102 = scalar_select %p99, %s100, %s101
      %p105 = pneg %p99
      %p106 = scmp.eq.s32.totalorder %s38, 6
      %p107 = por %p105, %p106
      %p108 = scmp.ne.s32.totalorder %s100, %s103
      %p109 = scmp.eq.s32.totalorder %s38, 0
      %p110 = por %p108, %p109
      %p111 = scmp.ne.s32.totalorder %s100, %s103
      %p112 = scmp.eq.s32.totalorder %s43, 6
      %p113 = por %p111, %p112
      %p114 = scmp.ne.s32.totalorder %s103, %s104
      %p115 = scmp.eq.s32.totalorder %s43, 0
      %p116 = por %p114, %p115
      %p117 = scmp.ne.s32.totalorder %s103, %s104
      %p118 = scmp.eq.s32.totalorder %s44, 6
      %p119 = por %p117, %p118
      %p121 = scmp.ne.s32.totalorder %s104, %s120
      %p122 = scmp.eq.s32.totalorder %s44, 0
      %p123 = por %p121, %p122
      %s124 = ssub.s32 %s38, %s45
      %p125 = scmp.eq.s32.totalorder %s124, 0
      %s127 = sadd.s32 %s126, 1
      %s128 = scalar_select %p125, %s126, %s127
      %p131 = pneg %p125
      %p132 = scmp.eq.s32.totalorder %s38, 6
      %p133 = por %p131, %p132
      %p134 = scmp.ne.s32.totalorder %s126, %s129
      %p135 = scmp.eq.s32.totalorder %s38, 0
      %p136 = por %p134, %p135
      %p137 = scmp.ne.s32.totalorder %s126, %s129
      %p138 = scmp.eq.s32.totalorder %s43, 6
      %p139 = por %p137, %p138
      %p140 = scmp.ne.s32.totalorder %s129, %s130
      %p141 = scmp.eq.s32.totalorder %s43, 0
      %p142 = por %p140, %p141
      %p143 = scmp.ne.s32.totalorder %s129, %s130
      %p144 = scmp.eq.s32.totalorder %s44, 6
      %p145 = por %p143, %p144
      %p147 = scmp.ne.s32.totalorder %s130, %s146
      %p148 = scmp.eq.s32.totalorder %s44, 0
      %p149 = por %p147, %p148
      %s150 = ssub.s32 %s38, %s45
      %p151 = scmp.eq.s32.totalorder %s150, 0
      %s153 = sadd.s32 %s152, 1
      %s154 = scalar_select %p151, %s152, %s153
      %p157 = pneg %p151
      %p158 = scmp.eq.s32.totalorder %s38, 6
      %p159 = por %p157, %p158
      %p160 = scmp.ne.s32.totalorder %s152, %s155
      %p161 = scmp.eq.s32.totalorder %s38, 0
      %p162 = por %p160, %p161
      %p163 = scmp.ne.s32.totalorder %s152, %s155
      %p164 = scmp.eq.s32.totalorder %s43, 6
      %p165 = por %p163, %p164
      %p166 = scmp.ne.s32.totalorder %s155, %s156
      %p167 = scmp.eq.s32.totalorder %s43, 0
      %p168 = por %p166, %p167
      %p169 = scmp.ne.s32.totalorder %s155, %s156
      %p170 = scmp.eq.s32.totalorder %s44, 6
      %p171 = por %p169, %p170
      %p173 = scmp.ne.s32.totalorder %s156, %s172
      %p174 = scmp.eq.s32.totalorder %s44, 0
      %p175 = por %p173, %p174
      %s176 = ssub.s32 %s38, %s45
      %p177 = scmp.eq.s32.totalorder %s176, 0
      %s179 = sadd.s32 %s178, 1
      %s180 = scalar_select %p177, %s178, %s179
      %p183 = pneg %p177
      %p184 = scmp.eq.s32.totalorder %s38, 6
      %p185 = por %p183, %p184
      %p186 = scmp.ne.s32.totalorder %s178, %s181
      %p187 = scmp.eq.s32.totalorder %s38, 0
      %p188 = por %p186, %p187
      %p189 = scmp.ne.s32.totalorder %s178, %s181
      %p190 = scmp.eq.s32.totalorder %s43, 6
      %p191 = por %p189, %p190
      %p192 = scmp.ne.s32.totalorder %s181, %s182
      %p193 = scmp.eq.s32.totalorder %s43, 0
      %p194 = por %p192, %p193
      %p195 = scmp.ne.s32.totalorder %s181, %s182
      %p196 = scmp.eq.s32.totalorder %s44, 6
      %p197 = por %p195, %p196
      %p199 = scmp.ne.s32.totalorder %s182, %s198
      %p200 = scmp.eq.s32.totalorder %s44, 0
      %p201 = por %p199, %p200
      %s202 = ssub.s32 %s38, %s45
      %p203 = scmp.eq.s32.totalorder %s202, 0
      %s205 = sadd.s32 %s204, 1
      %s206 = scalar_select %p203, %s204, %s205
      %p209 = pneg %p203
      %p210 = scmp.eq.s32.totalorder %s38, 6
      %p211 = por %p209, %p210
      %p212 = scmp.ne.s32.totalorder %s204, %s207
      %p213 = scmp.eq.s32.totalorder %s38, 0
      %p214 = por %p212, %p213
      %p215 = scmp.ne.s32.totalorder %s204, %s207
      %p216 = scmp.eq.s32.totalorder %s43, 6
      %p217 = por %p215, %p216
      %p218 = scmp.ne.s32.totalorder %s207, %s208
      %p219 = scmp.eq.s32.totalorder %s43, 0
      %p220 = por %p218, %p219
      %p221 = scmp.ne.s32.totalorder %s207, %s208
      %p222 = scmp.eq.s32.totalorder %s44, 6
      %p223 = por %p221, %p222
      %p225 = scmp.ne.s32.totalorder %s208, %s224
      %p226 = scmp.eq.s32.totalorder %s44, 0
      %p227 = por %p225, %p226
      %s228 = ssub.s32 %s38, %s45
      %p229 = scmp.eq.s32.totalorder %s228, 0
      %s231 = sadd.s32 %s230, 1
      %s232 = scalar_select %p229, %s230, %s231
      %p235 = pneg %p229
      %p236 = scmp.eq.s32.totalorder %s38, 6
      %p237 = por %p235, %p236
      %p238 = scmp.ne.s32.totalorder %s230, %s233
      %p239 = scmp.eq.s32.totalorder %s38, 0
      %p240 = por %p238, %p239
      %p241 = scmp.ne.s32.totalorder %s230, %s233
      %p242 = scmp.eq.s32.totalorder %s43, 6
      %p243 = por %p241, %p242
      %p244 = scmp.ne.s32.totalorder %s233, %s234
      %p245 = scmp.eq.s32.totalorder %s43, 0
      %p246 = por %p244, %p245
      %p247 = scmp.ne.s32.totalorder %s233, %s234
      %p248 = scmp.eq.s32.totalorder %s44, 6
      %p249 = por %p247, %p248
      %p251 = scmp.ne.s32.totalorder %s234, %s250
      %p252 = scmp.eq.s32.totalorder %s44, 0
      %p253 = por %p251, %p252
      %s255 = sadd.s32 %s254, 1
      %p258 = scmp.eq.s32.totalorder %s38, 6
      %p259 = scmp.ne.s32.totalorder %s254, %s256
      %p260 = scmp.eq.s32.totalorder %s38, 0
      %p261 = por %p259, %p260
      %p262 = scmp.ne.s32.totalorder %s254, %s256
      %p263 = scmp.eq.s32.totalorder %s43, 6
      %p264 = por %p262, %p263
      %p265 = scmp.ne.s32.totalorder %s256, %s257
      %p266 = scmp.eq.s32.totalorder %s43, 0
      %p267 = por %p265, %p266
      %p268 = scmp.ne.s32.totalorder %s256, %s257
      %p269 = scmp.eq.s32.totalorder %s44, 6
      %p270 = por %p268, %p269
      %p272 = scmp.ne.s32.totalorder %s257, %s271
      %p273 = scmp.eq.s32.totalorder %s44, 0
      %p274 = por %p272, %p273
      %s276 = sadd.s32 %s275, 1
      %p279 = scmp.eq.s32.totalorder %s38, 6
      %p280 = scmp.ne.s32.totalorder %s275, %s277
      %p281 = scmp.eq.s32.totalorder %s38, 0
      %p282 = por %p280, %p281
      %p283 = scmp.ne.s32.totalorder %s275, %s277
      %p284 = scmp.eq.s32.totalorder %s43, 6
      %p285 = por %p283, %p284
      %p286 = scmp.ne.s32.totalorder %s277, %s278
      %p287 = scmp.eq.s32.totalorder %s43, 0
      %p288 = por %p286, %p287
      %p289 = scmp.ne.s32.totalorder %s277, %s278
      %p290 = scmp.eq.s32.totalorder %s44, 6
      %p291 = por %p289, %p290
      %p293 = scmp.ne.s32.totalorder %s278, %s292
      %p294 = scmp.eq.s32.totalorder %s44, 0
      %p295 = por %p293, %p294
      %s297 = sadd.s32 %s296, 1
      %p300 = scmp.eq.s32.totalorder %s38, 6
      %p301 = scmp.ne.s32.totalorder %s296, %s298
      %p302 = scmp.eq.s32.totalorder %s38, 0
      %p303 = por %p301, %p302
      %p304 = scmp.ne.s32.totalorder %s296, %s298
      %p305 = scmp.eq.s32.totalorder %s43, 6
      %p306 = por %p304, %p305
      %p307 = scmp.ne.s32.totalorder %s298, %s299
      %p308 = scmp.eq.s32.totalorder %s43, 0
      %p309 = por %p307, %p308
      %p310 = scmp.ne.s32.totalorder %s298, %s299
      %p311 = scmp.eq.s32.totalorder %s44, 6
      %p312 = por %p310, %p311
      %p314 = scmp.ne.s32.totalorder %s299, %s313
      %p315 = scmp.eq.s32.totalorder %s44, 0
      %p316 = por %p314, %p315
      %s318 = sadd.s32 %s317, 1
      %p321 = scmp.eq.s32.totalorder %s38, 6
      %p322 = scmp.ne.s32.totalorder %s317, %s319
      %p323 = scmp.eq.s32.totalorder %s38, 0
      %p324 = por %p322, %p323
      %p325 = scmp.ne.s32.totalorder %s317, %s319
      %p326 = scmp.eq.s32.totalorder %s43, 6
      %p327 = por %p325, %p326
      %p328 = scmp.ne.s32.totalorder %s319, %s320
      %p329 = scmp.eq.s32.totalorder %s43, 0
      %p330 = por %p328, %p329
      %p331 = scmp.ne.s32.totalorder %s319, %s320
      %p332 = scmp.eq.s32.totalorder %s44, 6
      %p333 = por %p331, %p332
      %p335 = scmp.ne.s32.totalorder %s320, %s334
      %p336 = scmp.eq.s32.totalorder %s44, 0
      %p337 = por %p335, %p336
      %s338 = ssub.s32 %s38, %s45
      %p339 = scmp.eq.s32.totalorder %s338, 0
      %s341 = sadd.s32 %s340, 1
      %s342 = scalar_select %p339, %s340, %s341
      %p345 = pneg %p339
      %p346 = scmp.eq.s32.totalorder %s38, 6
      %p347 = por %p345, %p346
      %p348 = scmp.ne.s32.totalorder %s340, %s343
      %p349 = scmp.eq.s32.totalorder %s38, 0
      %p350 = por %p348, %p349
      %p351 = scmp.ne.s32.totalorder %s340, %s343
      %p352 = scmp.eq.s32.totalorder %s43, 6
      %p353 = por %p351, %p352
      %p354 = scmp.ne.s32.totalorder %s343, %s344
      %p355 = scmp.eq.s32.totalorder %s43, 0
      %p356 = por %p354, %p355
      %p357 = scmp.ne.s32.totalorder %s343, %s344
      %p358 = scmp.eq.s32.totalorder %s44, 6
      %p359 = por %p357, %p358
      %p361 = scmp.ne.s32.totalorder %s344, %s360
      %p362 = scmp.eq.s32.totalorder %s44, 0
      %p363 = por %p361, %p362
      %p364 = scmp.le.s32.totalorder 1, %s38
      %p365 = scmp.lt.s32.totalorder %s38, 8
      %p366 = pnand %p364, %p365
      %p367 = pneg %p366
      // Predicated region
      $region9: #{tpu_custom_call.1} parent=5 // pred_check
        _
      $region10: #{tpu_custom_call.1} parent=5 // pred_check_branch
        %369 = sbr.rel (%p366) target = $region12
      $region11: #{tpu_custom_call.1} parent=5 // pred_region
        %s370 = ssub.s32 %s38, 1
        // Predicated region
        $region13: #{tpu_custom_call.1} parent=11 // pred_check
          %p371 = pneg %p267
        $region14: #{tpu_custom_call.1} parent=11 // pred_check_branch
          %373 = sbr.rel (%p371) target = $region16
        $region15: #{tpu_custom_call.1} parent=11 // pred_region
          %s375 = ssub.s32 4096, 4096
          %376 = vsyncadd [#allocation17], %s375
          %s377 = sshll.u32 [#allocation18], 4
          %s378 = int_to_ptr.vmem [resolvable:$true] %s377
          %383 = dma.hbm_to_vmem [thread:$0]  %s8, 4096, %s378, [#allocation17], 128, 128, 8
        $region16: #{tpu_custom_call.1} parent=11 // pred_fallthru
          _
        // Predicated region
        $region17: #{tpu_custom_call.1} parent=11 // pred_check
          %p384 = pneg %p288
        $region18: #{tpu_custom_call.1} parent=11 // pred_check_branch
          %386 = sbr.rel (%p384) target = $region20
        $region19: #{tpu_custom_call.1} parent=11 // pred_region
          %s388 = ssub.s32 64, 64
          %389 = vsyncadd [#allocation20], %s388
          %s391 = sshll.u32 [#allocation19], 4
          %s392 = int_to_ptr.vmem [resolvable:$true] %s391
          %394 = dma.hbm_to_vmem [thread:$0]  %s9, 64, %s392, [#allocation20]
        $region20: #{tpu_custom_call.1} parent=11 // pred_fallthru
          _
        // Predicated region
        $region21: #{tpu_custom_call.1} parent=11 // pred_check
          %p395 = pneg %p309
        $region22: #{tpu_custom_call.1} parent=11 // pred_check_branch
          %397 = sbr.rel (%p395) target = $region24
        $region23: #{tpu_custom_call.1} parent=11 // pred_region
          %s399 = ssub.s32 128, 128
          %400 = vsyncadd [#allocation20], %s399
          %s402 = sshll.u32 [#allocation21], 4
          %s403 = int_to_ptr.vmem [resolvable:$true] %s402
          %405 = dma.hbm_to_vmem [thread:$0]  %s10, 128, %s403, [#allocation20]
        $region24: #{tpu_custom_call.1} parent=11 // pred_fallthru
          _
        // Predicated region
        $region25: #{tpu_custom_call.1} parent=11 // pred_check
          %p406 = pneg %p330
        $region26: #{tpu_custom_call.1} parent=11 // pred_check_branch
          %408 = sbr.rel (%p406) target = $region28
        $region27: #{tpu_custom_call.1} parent=11 // pred_region
          %s410 = ssub.s32 32, 32
          %411 = vsyncadd [#allocation23], %s410
          %s413 = sshll.u32 [#allocation22], 4
          %s414 = int_to_ptr.vmem [resolvable:$true] %s413
          %416 = dma.hbm_to_vmem [thread:$0]  %s11, 32, %s414, [#allocation23]
        $region28: #{tpu_custom_call.1} parent=11 // pred_fallthru
          _
      $region12: #{tpu_custom_call.1} parent=5 // pred_fallthru
        _
      %p417 = scmp.lt.s32.totalorder %s38, 7
      // Predicated region
      $region29: #{tpu_custom_call.1} parent=5 // pred_check
        %p418 = pneg %p417
      $region30: #{tpu_custom_call.1} parent=5 // pred_check_branch
        %420 = sbr.rel (%p418) target = $region32
      $region31: #{tpu_custom_call.1} parent=5 // pred_region
        // Predicated region
        $region33: #{tpu_custom_call.1} parent=31 // pred_check
          %p421 = pneg %p58
        $region34: #{tpu_custom_call.1} parent=31 // pred_check_branch
          %423 = sbr.rel (%p421) target = $region36
        $region35: #{tpu_custom_call.1} parent=31 // pred_region
          %s424 = sand.u32 %s48, 1
          %s425 = scalar_lea.sflag [#allocation5], %s424
          %s426 = sand.u32 %s48, 1
          %s427 = smul.addr %s426, 16
          %s428 = scalar_lea.vmem [#allocation4], %s427
          %s430 = ssub.s32 256, 256
          %431 = vsyncadd %s425, %s430
          %s432 = smul.addr %s38, 2
          %s433 = smul.addr %s432, 128
          %s434 = scalar_lea.hbm %s0, %s433
          %s436 = sshll.u32 %s428, 4
          %s437 = int_to_ptr.vmem [resolvable:$true] %s436
          %439 = dma.hbm_to_vmem [thread:$0]  %s434, 256, %s437, %s425
        $region36: #{tpu_custom_call.1} parent=31 // pred_fallthru
          _
        // Predicated region
        $region37: #{tpu_custom_call.1} parent=31 // pred_check
          %p440 = pneg %p84
        $region38: #{tpu_custom_call.1} parent=31 // pred_check_branch
          %442 = sbr.rel (%p440) target = $region40
        $region39: #{tpu_custom_call.1} parent=31 // pred_region
          %s443 = sand.u32 %s38, 1
          %s444 = scalar_lea.sflag [#allocation8], %s443
          %s445 = sand.u32 %s74, 1
          %s446 = smul.addr %s445, 8
          %s447 = scalar_lea.vmem [#allocation7], %s446
          %s449 = ssub.s32 128, 128
          %450 = vsyncadd %s444, %s449
          %s451 = smul.addr %s38, 128
          %s452 = scalar_lea.hbm %s1, %s451
          %s454 = sshll.u32 %s447, 4
          %s455 = int_to_ptr.vmem [resolvable:$true] %s454
          %457 = dma.hbm_to_vmem [thread:$0]  %s452, 128, %s455, %s444
        $region40: #{tpu_custom_call.1} parent=31 // pred_fallthru
          _
        // Predicated region
        $region41: #{tpu_custom_call.1} parent=31 // pred_check
          %p458 = pneg %p110
        $region42: #{tpu_custom_call.1} parent=31 // pred_check_branch
          %460 = sbr.rel (%p458) target = $region44
        $region43: #{tpu_custom_call.1} parent=31 // pred_region
          %s461 = sand.u32 %s38, 1
          %s462 = scalar_lea.sflag [#allocation8], %s461
          %s463 = sand.u32 %s100, 1
          %s464 = smul.addr %s463, 4
          %s465 = scalar_lea.vmem [#allocation9], %s464
          %s467 = ssub.s32 64, 64
          %468 = vsyncadd %s462, %s467
          %s469 = smul.addr %s38, 64
          %s470 = scalar_lea.hbm %s2, %s469
          %s472 = sshll.u32 %s465, 4
          %s473 = int_to_ptr.vmem [resolvable:$true] %s472
          %475 = dma.hbm_to_vmem [thread:$0]  %s470, 64, %s473, %s462
        $region44: #{tpu_custom_call.1} parent=31 // pred_fallthru
          _
        // Predicated region
        $region45: #{tpu_custom_call.1} parent=31 // pred_check
          %p476 = pneg %p136
        $region46: #{tpu_custom_call.1} parent=31 // pred_check_branch
          %478 = sbr.rel (%p476) target = $region48
        $region47: #{tpu_custom_call.1} parent=31 // pred_region
          %s479 = sand.u32 %s38, 1
          %s480 = scalar_lea.sflag [#allocation11], %s479
          %s481 = sand.u32 %s126, 1
          %s482 = smul.addr %s481, 4
          %s483 = scalar_lea.vmem [#allocation10], %s482
          %s485 = ssub.s32 64, 64
          %486 = vsyncadd %s480, %s485
          %s487 = smul.addr %s38, 64
          %s488 = scalar_lea.hbm %s3, %s487
          %s490 = sshll.u32 %s483, 4
          %s491 = int_to_ptr.vmem [resolvable:$true] %s490
          %493 = dma.hbm_to_vmem [thread:$0]  %s488, 64, %s491, %s480
        $region48: #{tpu_custom_call.1} parent=31 // pred_fallthru
          _
        // Predicated region
        $region49: #{tpu_custom_call.1} parent=31 // pred_check
          %p494 = pneg %p162
        $region50: #{tpu_custom_call.1} parent=31 // pred_check_branch
          %496 = sbr.rel (%p494) target = $region52
        $region51: #{tpu_custom_call.1} parent=31 // pred_region
          %s497 = sand.u32 %s38, 1
          %s498 = scalar_lea.sflag [#allocation11], %s497
          %s499 = sand.u32 %s152, 1
          %s500 = smul.addr %s499, 8
          %s501 = scalar_lea.vmem [#allocation12], %s500
          %s503 = ssub.s32 128, 128
          %504 = vsyncadd %s498, %s503
          %s505 = smul.addr %s38, 128
          %s506 = scalar_lea.hbm %s4, %s505
          %s508 = sshll.u32 %s501, 4
          %s509 = int_to_ptr.vmem [resolvable:$true] %s508
          %511 = dma.hbm_to_vmem [thread:$0]  %s506, 128, %s509, %s498
        $region52: #{tpu_custom_call.1} parent=31 // pred_fallthru
          _
        // Predicated region
        $region53: #{tpu_custom_call.1} parent=31 // pred_check
          %p512 = pneg %p188
        $region54: #{tpu_custom_call.1} parent=31 // pred_check_branch
          %514 = sbr.rel (%p512) target = $region56
        $region55: #{tpu_custom_call.1} parent=31 // pred_region
          %s515 = sand.u32 %s38, 1
          %s516 = scalar_lea.sflag [#allocation14], %s515
          %s517 = sand.u32 %s178, 1
          %s518 = smul.addr %s517, 8
          %s519 = scalar_lea.vmem [#allocation13], %s518
          %s521 = ssub.s32 128, 128
          %522 = vsyncadd %s516, %s521
          %s523 = smul.addr %s38, 128
          %s524 = scalar_lea.hbm %s5, %s523
          %s526 = sshll.u32 %s519, 4
          %s527 = int_to_ptr.vmem [resolvable:$true] %s526
          %529 = dma.hbm_to_vmem [thread:$0]  %s524, 128, %s527, %s516
        $region56: #{tpu_custom_call.1} parent=31 // pred_fallthru
          _
        // Predicated region
        $region57: #{tpu_custom_call.1} parent=31 // pred_check
          %p530 = pneg %p214
        $region58: #{tpu_custom_call.1} parent=31 // pred_check_branch
          %532 = sbr.rel (%p530) target = $region60
        $region59: #{tpu_custom_call.1} parent=31 // pred_region
          %s533 = sand.u32 %s38, 1
          %s534 = scalar_lea.sflag [#allocation14], %s533
          %s535 = sand.u32 %s204, 1
          %s536 = smul.addr %s535, 8
          %s537 = scalar_lea.vmem [#allocation15], %s536
          %s539 = ssub.s32 128, 128
          %540 = vsyncadd %s534, %s539
          %s541 = smul.addr %s38, 128
          %s542 = scalar_lea.hbm %s6, %s541
          %s544 = sshll.u32 %s537, 4
          %s545 = int_to_ptr.vmem [resolvable:$true] %s544
          %547 = dma.hbm_to_vmem [thread:$0]  %s542, 128, %s545, %s534
        $region60: #{tpu_custom_call.1} parent=31 // pred_fallthru
          _
        // Predicated region
        $region61: #{tpu_custom_call.1} parent=31 // pred_check
          %p548 = pneg %p240
        $region62: #{tpu_custom_call.1} parent=31 // pred_check_branch
          %550 = sbr.rel (%p548) target = $region64
        $region63: #{tpu_custom_call.1} parent=31 // pred_region
          %s551 = sand.u32 %s38, 1
          %s552 = scalar_lea.sflag [#allocation17], %s551
          %s553 = sand.u32 %s230, 1
          %s554 = smul.addr %s553, 8
          %s555 = scalar_lea.vmem [#allocation16], %s554
          %s557 = ssub.s32 128, 128
          %558 = vsyncadd %s552, %s557
          %s559 = smul.addr %s38, 128
          %s560 = scalar_lea.hbm %s7, %s559
          %s562 = sshll.u32 %s555, 4
          %s563 = int_to_ptr.vmem [resolvable:$true] %s562
          %565 = dma.hbm_to_vmem [thread:$0]  %s560, 128, %s563, %s552
        $region64: #{tpu_custom_call.1} parent=31 // pred_fallthru
          _
      $region32: #{tpu_custom_call.1} parent=5 // pred_fallthru
        _
      %p566 = scmp.le.s32.totalorder 1, %s38
      %p567 = scmp.lt.s32.totalorder %s38, 8
      %p568 = pnand %p566, %p567
      %p569 = pneg %p568
      // Predicated region
      $region65: #{tpu_custom_call.1} parent=5 // pred_check
        _
      $region66: #{tpu_custom_call.1} parent=5 // pred_check_branch
        %571 = sbr.rel (%p568) target = $region68
      $region67: #{tpu_custom_call.1} parent=5 // pred_region
        %s572 = ssub.s32 %s38, 1
        %s573 = sand.u32 %s51, 1
        %s574 = scalar_lea.sflag [#allocation5], %s573
        %s575 = sand.u32 %s51, 1
        %s576 = smul.addr %s575, 16
        %s577 = scalar_lea.vmem [#allocation4], %s576
        // Predicated region
        $region69: #{tpu_custom_call.1} parent=67 // pred_check
          %p578 = pneg %p64
        $region70: #{tpu_custom_call.1} parent=67 // pred_check_branch
          %580 = sbr.rel (%p578) target = $region72
        $region71: #{tpu_custom_call.1} parent=67 // pred_region
          %581 = dma.done %s574, 256
        $region72: #{tpu_custom_call.1} parent=67 // pred_fallthru
          _
        %s582 = sand.u32 %s43, 1
        %s583 = scalar_lea.sflag [#allocation8], %s582
        %s584 = sand.u32 %s77, 1
        %s585 = smul.addr %s584, 8
        %s586 = scalar_lea.vmem [#allocation7], %s585
        // Predicated region
        $region73: #{tpu_custom_call.1} parent=67 // pred_check
          %p587 = pneg %p90
        $region74: #{tpu_custom_call.1} parent=67 // pred_check_branch
          %589 = sbr.rel (%p587) target = $region76
        $region75: #{tpu_custom_call.1} parent=67 // pred_region
          %590 = dma.done %s583, 128
        $region76: #{tpu_custom_call.1} parent=67 // pred_fallthru
          _
        %s591 = sand.u32 %s43, 1
        %s592 = scalar_lea.sflag [#allocation8], %s591
        %s593 = sand.u32 %s103, 1
        %s594 = smul.addr %s593, 4
        %s595 = scalar_lea.vmem [#allocation9], %s594
        // Predicated region
        $region77: #{tpu_custom_call.1} parent=67 // pred_check
          %p596 = pneg %p116
        $region78: #{tpu_custom_call.1} parent=67 // pred_check_branch
          %598 = sbr.rel (%p596) target = $region80
        $region79: #{tpu_custom_call.1} parent=67 // pred_region
          %599 = dma.done %s592, 64
        $region80: #{tpu_custom_call.1} parent=67 // pred_fallthru
          _
        %s600 = sand.u32 %s43, 1
        %s601 = scalar_lea.sflag [#allocation11], %s600
        %s602 = sand.u32 %s129, 1
        %s603 = smul.addr %s602, 4
        %s604 = scalar_lea.vmem [#allocation10], %s603
        // Predicated region
        $region81: #{tpu_custom_call.1} parent=67 // pred_check
          %p605 = pneg %p142
        $region82: #{tpu_custom_call.1} parent=67 // pred_check_branch
          %607 = sbr.rel (%p605) target = $region84
        $region83: #{tpu_custom_call.1} parent=67 // pred_region
          %608 = dma.done %s601, 64
        $region84: #{tpu_custom_call.1} parent=67 // pred_fallthru
          _
        %s609 = sand.u32 %s43, 1
        %s610 = scalar_lea.sflag [#allocation11], %s609
        %s611 = sand.u32 %s155, 1
        %s612 = smul.addr %s611, 8
        %s613 = scalar_lea.vmem [#allocation12], %s612
        // Predicated region
        $region85: #{tpu_custom_call.1} parent=67 // pred_check
          %p614 = pneg %p168
        $region86: #{tpu_custom_call.1} parent=67 // pred_check_branch
          %616 = sbr.rel (%p614) target = $region88
        $region87: #{tpu_custom_call.1} parent=67 // pred_region
          %617 = dma.done %s610, 128
        $region88: #{tpu_custom_call.1} parent=67 // pred_fallthru
          _
        %s618 = sand.u32 %s43, 1
        %s619 = scalar_lea.sflag [#allocation14], %s618
        %s620 = sand.u32 %s181, 1
        %s621 = smul.addr %s620, 8
        %s622 = scalar_lea.vmem [#allocation13], %s621
        // Predicated region
        $region89: #{tpu_custom_call.1} parent=67 // pred_check
          %p623 = pneg %p194
        $region90: #{tpu_custom_call.1} parent=67 // pred_check_branch
          %625 = sbr.rel (%p623) target = $region92
        $region91: #{tpu_custom_call.1} parent=67 // pred_region
          %626 = dma.done %s619, 128
        $region92: #{tpu_custom_call.1} parent=67 // pred_fallthru
          _
        %s627 = sand.u32 %s43, 1
        %s628 = scalar_lea.sflag [#allocation14], %s627
        %s629 = sand.u32 %s207, 1
        %s630 = smul.addr %s629, 8
        %s631 = scalar_lea.vmem [#allocation15], %s630
        // Predicated region
        $region93: #{tpu_custom_call.1} parent=67 // pred_check
          %p632 = pneg %p220
        $region94: #{tpu_custom_call.1} parent=67 // pred_check_branch
          %634 = sbr.rel (%p632) target = $region96
        $region95: #{tpu_custom_call.1} parent=67 // pred_region
          %635 = dma.done %s628, 128
        $region96: #{tpu_custom_call.1} parent=67 // pred_fallthru
          _
        %s636 = sand.u32 %s43, 1
        %s637 = scalar_lea.sflag [#allocation17], %s636
        %s638 = sand.u32 %s233, 1
        %s639 = smul.addr %s638, 8
        %s640 = scalar_lea.vmem [#allocation16], %s639
        // Predicated region
        $region97: #{tpu_custom_call.1} parent=67 // pred_check
          %p641 = pneg %p246
        $region98: #{tpu_custom_call.1} parent=67 // pred_check_branch
          %643 = sbr.rel (%p641) target = $region100
        $region99: #{tpu_custom_call.1} parent=67 // pred_region
          %644 = dma.done %s637, 128
        $region100: #{tpu_custom_call.1} parent=67 // pred_fallthru
          _
        // Predicated region
        $region101: #{tpu_custom_call.1} parent=67 // pred_check
          %p645 = pneg %p267
        $region102: #{tpu_custom_call.1} parent=67 // pred_check_branch
          %647 = sbr.rel (%p645) target = $region104
        $region103: #{tpu_custom_call.1} parent=67 // pred_region
          %648 = dma.done [#allocation17], 4096
        $region104: #{tpu_custom_call.1} parent=67 // pred_fallthru
          _
        // Predicated region
        $region105: #{tpu_custom_call.1} parent=67 // pred_check
          %p649 = pneg %p288
        $region106: #{tpu_custom_call.1} parent=67 // pred_check_branch
          %651 = sbr.rel (%p649) target = $region108
        $region107: #{tpu_custom_call.1} parent=67 // pred_region
          %652 = dma.done [#allocation20], 64
        $region108: #{tpu_custom_call.1} parent=67 // pred_fallthru
          _
        // Predicated region
        $region109: #{tpu_custom_call.1} parent=67 // pred_check
          %p653 = pneg %p309
        $region110: #{tpu_custom_call.1} parent=67 // pred_check_branch
          %655 = sbr.rel (%p653) target = $region112
        $region111: #{tpu_custom_call.1} parent=67 // pred_region
          %656 = dma.done [#allocation20], 128
        $region112: #{tpu_custom_call.1} parent=67 // pred_fallthru
          _
        // Predicated region
        $region113: #{tpu_custom_call.1} parent=67 // pred_check
          %p657 = pneg %p330
        $region114: #{tpu_custom_call.1} parent=67 // pred_check_branch
          %659 = sbr.rel (%p657) target = $region116
        $region115: #{tpu_custom_call.1} parent=67 // pred_region
          %660 = dma.done [#allocation23], 32
        $region116: #{tpu_custom_call.1} parent=67 // pred_fallthru
          _
        %s661 = sand.u32 %s51, 1
        %s662 = scalar_lea.sflag [#allocation5], %s661
        %s663 = sand.u32 %s51, 1
        %s664 = smul.addr %s663, 16
        %s665 = scalar_lea.vmem [#allocation4], %s664
        %p666 = pneg %p64
        %p667 = pneg %p61
        %s668 = sand.u32 %s43, 1
        %s669 = scalar_lea.sflag [#allocation8], %s668
        %s670 = sand.u32 %s77, 1
        %s671 = smul.addr %s670, 8
        %s672 = scalar_lea.vmem [#allocation7], %s671
        %p673 = pneg %p90
        %p674 = pneg %p87
        %s675 = sand.u32 %s43, 1
        %s676 = scalar_lea.sflag [#allocation8], %s675
        %s677 = sand.u32 %s103, 1
        %s678 = smul.addr %s677, 4
        %s679 = scalar_lea.vmem [#allocation9], %s678
        %p680 = pneg %p116
        %p681 = pneg %p113
        %s682 = sand.u32 %s43, 1
        %s683 = scalar_lea.sflag [#allocation11], %s682
        %s684 = sand.u32 %s129, 1
        %s685 = smul.addr %s684, 4
        %s686 = scalar_lea.vmem [#allocation10], %s685
        %p687 = pneg %p142
        %p688 = pneg %p139
        %s689 = sand.u32 %s43, 1
        %s690 = scalar_lea.sflag [#allocation11], %s689
        %s691 = sand.u32 %s155, 1
        %s692 = smul.addr %s691, 8
        %s693 = scalar_lea.vmem [#allocation12], %s692
        %p694 = pneg %p168
        %p695 = pneg %p165
        %s696 = sand.u32 %s43, 1
        %s697 = scalar_lea.sflag [#allocation14], %s696
        %s698 = sand.u32 %s181, 1
        %s699 = smul.addr %s698, 8
        %s700 = scalar_lea.vmem [#allocation13], %s699
        %p701 = pneg %p194
        %p702 = pneg %p191
        %s703 = sand.u32 %s43, 1
        %s704 = scalar_lea.sflag [#allocation14], %s703
        %s705 = sand.u32 %s207, 1
        %s706 = smul.addr %s705, 8
        %s707 = scalar_lea.vmem [#allocation15], %s706
        %p708 = pneg %p220
        %p709 = pneg %p217
        %s710 = sand.u32 %s43, 1
        %s711 = scalar_lea.sflag [#allocation17], %s710
        %s712 = sand.u32 %s233, 1
        %s713 = smul.addr %s712, 8
        %s714 = scalar_lea.vmem [#allocation16], %s713
        %p715 = pneg %p246
        %p716 = pneg %p243
        %p717 = pneg %p267
        %p718 = pneg %p264
        %p719 = pneg %p288
        %p720 = pneg %p285
        %p721 = pneg %p309
        %p722 = pneg %p306
        %p723 = pneg %p330
        %p724 = pneg %p327
        %p725 = pneg %p356
        %p726 = pneg %p353
        %s727 = sand.u32 %s343, 1
        %s728 = scalar_lea.sflag [#allocation6], %s727
        %s729 = sand.u32 %s343, 1
        %s730 = smul.addr %s729, 16
        %s731 = scalar_lea.vmem [#allocation24], %s730
        %p732 = scmp.eq.s32.totalorder %s43, 0
        // Predicated region
        $region117: #{tpu_custom_call.1} parent=67 // pred_check
          %p733 = pneg %p732
        $region118: #{tpu_custom_call.1} parent=67 // pred_check_branch
          %735 = sbr.rel (%p733) target = $region120
        $region119: #{tpu_custom_call.1} parent=67 // pred_region
          %v736 = vld [vmem:[%s577] sm:$0xff]
          %v737 = vld [vmem:[%s577 + $0x8] sm:$0xff]
          %738 = vst [vmem:[#allocation2] sm:$0xff] %v736
          %739 = vst [vmem:[#allocation2 + $0x8] sm:$0xff] %v737
        $region120: #{tpu_custom_call.1} parent=67 // pred_fallthru
          _
        %p740 = scmp.gt.s32.totalorder %s43, 0
        // Predicated region
        $region121: #{tpu_custom_call.1} parent=67 // pred_check
          %p741 = pneg %p740
        $region122: #{tpu_custom_call.1} parent=67 // pred_check_branch
          %743 = sbr.rel (%p741) target = $region124
        $region123: #{tpu_custom_call.1} parent=67 // pred_region
          %v744 = vld [vmem:[#allocation2] sm:$0xff]
          %v745 = vld [vmem:[#allocation2 + $0x8] sm:$0xff]
          %v746 = vld [vmem:[%s577] sm:$0xff]
          %v747 = vld [vmem:[%s577 + $0x8] sm:$0xff]
          %v748 = vadd.f32 %v744, %v746
          %v749 = vadd.f32 %v745, %v747
          %750 = vst [vmem:[#allocation2] sm:$0xff] %v748
          %751 = vst [vmem:[#allocation2 + $0x8] sm:$0xff] %v749
        $region124: #{tpu_custom_call.1} parent=67 // pred_fallthru
          _
        %v752 = vld [vmem:[#allocation2] sm:$0xff]
        %v753 = vld [vmem:[#allocation2 + $0x8] sm:$0xff]
        %vm754 = vcmask 23552
        %755 = vst.msk [vmem:[#allocation3] sm:$0xff] %vm754, 0.0
        %758 = vrot.lane.b32.xlu0 %v752, 3
        %v759 = vpop.permute.xlu0 %758
        %760 = vrot.lane.b32.xlu0 %v753, 3
        %v761 = vpop.permute.xlu0 %760
        %v762 = vsel %vm754, %v759, %v761
        %vm765 = vcmask 1047576
        %766 = vst.msk [vmem:[#allocation3] sm:$0xff] %vm765, %v759
        %767 = vst [vmem:[#allocation3 + $0x8] sm:$0xff] %v762
        %vm768 = vcmask 15360
        %769 = vst.msk [vmem:[#allocation3 + $0x10] sm:$0xff] %vm768, 0.0
        %770 = vrot.lane.b32.xlu0 %v752, 2
        %v771 = vpop.permute.xlu0 %770
        %772 = vrot.lane.b32.xlu0 %v753, 2
        %v773 = vpop.permute.xlu0 %772
        %v774 = vsel %vm768, %v771, %v773
        %vm777 = vcmask 1047568
        %778 = vst.msk [vmem:[#allocation3 + $0x10] sm:$0xff] %vm777, %v771
        %779 = vst [vmem:[#allocation3 + $0x18] sm:$0xff] %v774
        %vm780 = vcmask 7168
        %781 = vst.msk [vmem:[#allocation3 + $0x20] sm:$0xff] %vm780, 0.0
        %782 = vrot.lane.b32.xlu0 %v752, 1
        %v783 = vpop.permute.xlu0 %782
        %784 = vrot.lane.b32.xlu0 %v753, 1
        %v785 = vpop.permute.xlu0 %784
        %v786 = vsel %vm780, %v783, %v785
        %vm789 = vcmask 1047560
        %790 = vst.msk [vmem:[#allocation3 + $0x20] sm:$0xff] %vm789, %v783
        %791 = vst [vmem:[#allocation3 + $0x28] sm:$0xff] %v786
        %792 = vst [vmem:[#allocation3 + $0x30] sm:$0xff] %v752
        %793 = vst [vmem:[#allocation3 + $0x38] sm:$0xff] %v753
        %794 = vrot.lane.b32.xlu0 %v752, 127
        %v795 = vpop.permute.xlu0 %794
        %796 = vrot.lane.b32.xlu0 %v753, 127
        %v797 = vpop.permute.xlu0 %796
        %vm798 = vcmask 1039360
        %v799 = vsel %vm798, %v795, %v797
        %802 = vst [vmem:[#allocation3 + $0x40] sm:$0xff] %v799
        %803 = vst.msk [vmem:[#allocation3 + $0x48] sm:$0xff] %vm798, %v797
        %vm804 = vcmask 1048568
        %805 = vst.msk [vmem:[#allocation3 + $0x48] sm:$0xff] %vm804, 0.0
        %806 = vrot.lane.b32.xlu0 %v752, 126
        %v807 = vpop.permute.xlu0 %806
        %808 = vrot.lane.b32.xlu0 %v753, 126
        %v809 = vpop.permute.xlu0 %808
        %vm810 = vcmask 1031168
        %v811 = vsel %vm810, %v807, %v809
        %814 = vst [vmem:[#allocation3 + $0x50] sm:$0xff] %v811
        %815 = vst.msk [vmem:[#allocation3 + $0x58] sm:$0xff] %vm810, %v809
        %vm816 = vcmask 1048560
        %817 = vst.msk [vmem:[#allocation3 + $0x58] sm:$0xff] %vm816, 0.0
        %818 = vrot.lane.b32.xlu0 %v752, 125
        %v819 = vpop.permute.xlu0 %818
        %820 = vrot.lane.b32.xlu0 %v753, 125
        %v821 = vpop.permute.xlu0 %820
        %vm822 = vcmask 1022976
        %v823 = vsel %vm822, %v819, %v821
        %826 = vst [vmem:[#allocation3 + $0x60] sm:$0xff] %v823
        %827 = vst.msk [vmem:[#allocation3 + $0x68] sm:$0xff] %vm822, %v821
        %vm828 = vcmask 1048552
        %829 = vst.msk [vmem:[#allocation3 + $0x68] sm:$0xff] %vm828, 0.0
        %v830 = vld [vmem:[%s586] sm:$0xff]
        %v831 = vld [vmem:[#allocation3] sm:$0xff]
        %v832 = vld [vmem:[#allocation3 + $0x8] sm:$0xff]
        %v833 = vld [vmem:[#allocation3 + $0x10] sm:$0xff]
        %v834 = vld [vmem:[#allocation3 + $0x18] sm:$0xff]
        %v835 = vld [vmem:[#allocation3 + $0x20] sm:$0xff]
        %v836 = vld [vmem:[#allocation3 + $0x28] sm:$0xff]
        %v837 = vld [vmem:[#allocation3 + $0x30] sm:$0xff]
        %v838 = vld [vmem:[#allocation3 + $0x38] sm:$0xff]
        %v839 = vld [vmem:[#allocation3 + $0x40] sm:$0xff]
        %v840 = vld [vmem:[#allocation3 + $0x48] sm:$0xff]
        %v841 = vld [vmem:[#allocation3 + $0x50] sm:$0xff]
        %v842 = vld [vmem:[#allocation3 + $0x58] sm:$0xff]
        %v843 = vld [vmem:[#allocation3 + $0x60] sm:$0xff]
        %v844 = vld [vmem:[#allocation3 + $0x68] sm:$0xff]
        %vm845 = vcmask 457728
        %v847 = vsel %vm845, %v830, 0
        %849 = vmatprep.subr.mxu0 %v832
        %850 = vmatpush1.msra.mxu0 %v831
        %851 = vmatprep.subr.mxu0 %v834
        %852 = vmatpush1.msra.mxu0 %v833
        %853 = vmatprep.subr.mxu0 %v836
        %854 = vmatpush1.msra.mxu0 %v835
        %855 = vmatprep.subr.mxu0 %v838
        %856 = vmatpush1.msra.mxu0 %v837
        %857 = vmatprep.subr.mxu0 %v840
        %858 = vmatpush1.msra.mxu0 %v839
        %859 = vmatprep.subr.mxu0 %v842
        %860 = vmatpush1.msra.mxu0 %v841
        %861 = vmatprep.subr.mxu0 %v844
        %862 = vmatpush1.msra.mxu0 %v843
        %863 = vmatprep.subr.mxu0 0.0
        %864 = vmatpush1.msra.mxu0 0.0
        %865 = vmatprep.subr.mxu0 0.0
        %866 = vmatpush1.msra.mxu0 0.0
        %867 = vmatprep.subr.mxu0 0.0
        %868 = vmatpush1.msra.mxu0 0.0
        %869 = vmatprep.subr.mxu0 0.0
        %870 = vmatpush1.msra.mxu0 0.0
        %871 = vmatprep.subr.mxu0 0.0
        %872 = vmatpush1.msra.mxu0 0.0
        %873 = vmatprep.subr.mxu0 0.0
        %874 = vmatpush1.msra.mxu0 0.0
        %875 = vmatprep.subr.mxu0 0.0
        %876 = vmatpush1.msra.mxu0 0.0
        %877 = vmatprep.subr.mxu0 0.0
        %878 = vmatpush1.msra.mxu0 0.0
        %879 = vmatprep.subr.mxu0 0.0
        %880 = vmatpush1.msra.mxu0 0.0
        %881 = vmatprep.subr.mxu0 0.0
        %882 = vmatpush1.msra.mxu0 0.0
        %883 = vmatprep.subr.mxu0 0.0
        %884 = vmatpush1.msra.mxu0 0.0
        %885 = vmatprep.subr.mxu0 0.0
        %886 = vmatpush1.msra.mxu0 0.0
        %887 = vmatprep.subr.mxu0 0.0
        %888 = vmatpush1.msra.mxu0 0.0
        %889 = vmatprep.subr.mxu0 0.0
        %890 = vmatpush1.msra.mxu0 0.0
        %891 = vmatprep.subr.mxu0 0.0
        %892 = vmatpush1.msra.mxu0 0.0
        %893 = vmatprep.subr.mxu0 0.0
        %894 = vmatpush1.msra.mxu0 0.0
        %895 = vmatprep.subr.mxu0 0.0
        %896 = vmatpush1.msra.mxu0 0.0
        %897 = vmatprep.subr.mxu0 0.0
        %898 = vmatpush1.msra.mxu0 0.0
        %899 = vmatprep.subr.mxu0 0.0
        %900 = vmatpush1.msra.mxu0 0.0
        %901 = vmatprep.subr.mxu0 0.0
        %902 = vmatpush1.msra.mxu0 0.0
        %903 = vmatprep.subr.mxu0 0.0
        %904 = vmatpush1.msra.mxu0 0.0
        %905 = vmatprep.subr.mxu0 0.0
        %906 = vmatpush1.msra.mxu0 0.0
        %907 = vmatprep.subr.mxu0 0.0
        %908 = vmatpush1.msra.mxu0 0.0
        %909 = vmatprep.subr.mxu0 0.0
        %910 = vmatpush1.msra.mxu0 0.0
        %911 = vmatprep.subr.mxu0 0.0
        %912 = vmatpush1.msra.mxu0 0.0
        %913 = vmatprep.mubr.f32.mxu0 0.0
        %914 = vmatmul.mubr.f32.gmra.mrb[0].mxu0 %v847
        %v915 = vpop.f32.mrb[0].mxu0
        %v916 = vadd.f32 0.0, %v915
        %v917 = vpop.f32.mrb[0].mxu0
        %v918 = vadd.f32 0.0, %v917
        %919 = vdwg.mxu0
        %v920 = vld [vmem:[#allocation18] sm:$0xff]
        %v921 = vld [vmem:[#allocation18 + $0x8] sm:$0xff]
        %v922 = vld [vmem:[#allocation18 + $0x10] sm:$0xff]
        %v923 = vld [vmem:[#allocation18 + $0x18] sm:$0xff]
        %v924 = vld [vmem:[#allocation18 + $0x20] sm:$0xff]
        %v925 = vld [vmem:[#allocation18 + $0x28] sm:$0xff]
        %v926 = vld [vmem:[#allocation18 + $0x30] sm:$0xff]
        %v927 = vld [vmem:[#allocation18 + $0x38] sm:$0xff]
        %v928 = vld [vmem:[#allocation18 + $0x40] sm:$0xff]
        %v929 = vld [vmem:[#allocation18 + $0x48] sm:$0xff]
        %v930 = vld [vmem:[#allocation18 + $0x50] sm:$0xff]
        %v931 = vld [vmem:[#allocation18 + $0x58] sm:$0xff]
        %v932 = vld [vmem:[#allocation18 + $0x60] sm:$0xff]
        %v933 = vld [vmem:[#allocation18 + $0x68] sm:$0xff]
        %v934 = vld [vmem:[#allocation18 + $0x70] sm:$0xff]
        %v935 = vld [vmem:[#allocation18 + $0x78] sm:$0xff]
        %v936 = vld [vmem:[#allocation18 + $0x80] sm:$0xff]
        %v937 = vld [vmem:[#allocation18 + $0x88] sm:$0xff]
        %v938 = vld [vmem:[#allocation18 + $0x90] sm:$0xff]
        %v939 = vld [vmem:[#allocation18 + $0x98] sm:$0xff]
        %v940 = vld [vmem:[#allocation18 + $0xa0] sm:$0xff]
        %v941 = vld [vmem:[#allocation18 + $0xa8] sm:$0xff]
        %v942 = vld [vmem:[#allocation18 + $0xb0] sm:$0xff]
        %v943 = vld [vmem:[#allocation18 + $0xb8] sm:$0xff]
        %v944 = vld [vmem:[#allocation18 + $0xc0] sm:$0xff]
        %v945 = vld [vmem:[#allocation18 + $0xc8] sm:$0xff]
        %v946 = vld [vmem:[#allocation18 + $0xd0] sm:$0xff]
        %v947 = vld [vmem:[#allocation18 + $0xd8] sm:$0xff]
        %v948 = vld [vmem:[#allocation18 + $0xe0] sm:$0xff]
        %v949 = vld [vmem:[#allocation18 + $0xe8] sm:$0xff]
        %v950 = vld [vmem:[#allocation18 + $0xf0] sm:$0xff]
        %v951 = vld [vmem:[#allocation18 + $0xf8] sm:$0xff]
        %952 = vmatprep.subr.mxu0 0.0
        %953 = vmatpush1.msra.mxu0 %v920
        %954 = vmatprep.subr.mxu0 0.0
        %955 = vmatpush1.msra.mxu0 %v921
        %956 = vmatprep.subr.mxu0 0.0
        %957 = vmatpush1.msra.mxu0 %v922
        %958 = vmatprep.subr.mxu0 0.0
        %959 = vmatpush1.msra.mxu0 %v923
        %960 = vmatprep.subr.mxu0 0.0
        %961 = vmatpush1.msra.mxu0 %v924
        %962 = vmatprep.subr.mxu0 0.0
        %963 = vmatpush1.msra.mxu0 %v925
        %964 = vmatprep.subr.mxu0 0.0
        %965 = vmatpush1.msra.mxu0 %v926
        %966 = vmatprep.subr.mxu0 0.0
        %967 = vmatpush1.msra.mxu0 %v927
        %968 = vmatprep.subr.mxu0 0.0
        %969 = vmatpush1.msra.mxu0 %v928
        %970 = vmatprep.subr.mxu0 0.0
        %971 = vmatpush1.msra.mxu0 %v929
        %972 = vmatprep.subr.mxu0 0.0
        %973 = vmatpush1.msra.mxu0 %v930
        %974 = vmatprep.subr.mxu0 0.0
        %975 = vmatpush1.msra.mxu0 %v931
        %976 = vmatprep.subr.mxu0 0.0
        %977 = vmatpush1.msra.mxu0 %v932
        %978 = vmatprep.subr.mxu0 0.0
        %979 = vmatpush1.msra.mxu0 %v933
        %980 = vmatprep.subr.mxu0 0.0
        %981 = vmatpush1.msra.mxu0 %v934
        %982 = vmatprep.subr.mxu0 0.0
        %983 = vmatpush1.msra.mxu0 %v935
        %984 = vmatprep.subr.mxu0 0.0
        %985 = vmatpush1.msra.mxu0 %v936
        %986 = vmatprep.subr.mxu0 0.0
        %987 = vmatpush1.msra.mxu0 %v937
        %988 = vmatprep.subr.mxu0 0.0
        %989 = vmatpush1.msra.mxu0 %v938
        %990 = vmatprep.subr.mxu0 0.0
        %991 = vmatpush1.msra.mxu0 %v939
        %992 = vmatprep.subr.mxu0 0.0
        %993 = vmatpush1.msra.mxu0 %v940
        %994 = vmatprep.subr.mxu0 0.0
        %995 = vmatpush1.msra.mxu0 %v941
        %996 = vmatprep.subr.mxu0 0.0
        %997 = vmatpush1.msra.mxu0 %v942
        %998 = vmatprep.subr.mxu0 0.0
        %999 = vmatpush1.msra.mxu0 %v943
        %1000 = vmatprep.subr.mxu0 0.0
        %1001 = vmatpush1.msra.mxu0 %v944
        %1002 = vmatprep.subr.mxu0 0.0
        %1003 = vmatpush1.msra.mxu0 %v945
        %1004 = vmatprep.subr.mxu0 0.0
        %1005 = vmatpush1.msra.mxu0 %v946
        %1006 = vmatprep.subr.mxu0 0.0
        %1007 = vmatpush1.msra.mxu0 %v947
        %1008 = vmatprep.subr.mxu0 0.0
        %1009 = vmatpush1.msra.mxu0 %v948
        %1010 = vmatprep.subr.mxu0 0.0
        %1011 = vmatpush1.msra.mxu0 %v949
        %1012 = vmatprep.subr.mxu0 0.0
        %1013 = vmatpush1.msra.mxu0 %v950
        %1014 = vmatprep.subr.mxu0 0.0
        %1015 = vmatpush1.msra.mxu0 %v951
        %1016 = vmatprep.mubr.f32.mxu0 %v918
        %1017 = vmatmul.mubr.f32.gmra.mrb[0].mxu0 %v916
        %v1018 = vpop.f32.mrb[0].mxu0
        %v1019 = vadd.f32 0.0, %v1018
        %v1020 = vpop.f32.mrb[0].mxu0
        %1021 = vdwg.mxu0
        %v1022 = vld [vmem:[%s595] sm:$0xf]
        %v1023 = vld [vmem:[%s604] sm:$0xf]
        %1025 = vset.pattern.permute.xlu0 0
        %1026 = vperm.xlu0 %1025, %v1023
        %v1027 = vpop.permute.xlu0 %1026
        %vm1029 = vcmask 64512
        %v1031 = vsel %vm1029, %v1022, 0
        %1033 = vmatprep.subr.mxu0 0.0
        %1034 = vmatpush1.msra.mxu0 %v1019
        %1035 = vmatprep.subr.mxu0 0.0
        %1036 = vmatpush1.msra.mxu0 0.0
        %1037 = vmatprep.subr.mxu0 0.0
        %1038 = vmatpush1.msra.mxu0 0.0
        %1039 = vmatprep.subr.mxu0 0.0
        %1040 = vmatpush1.msra.mxu0 0.0
        %1041 = vmatprep.subr.mxu0 0.0
        %1042 = vmatpush1.msra.mxu0 0.0
        %1043 = vmatprep.subr.mxu0 0.0
        %1044 = vmatpush1.msra.mxu0 0.0
        %1045 = vmatprep.subr.mxu0 0.0
        %1046 = vmatpush1.msra.mxu0 0.0
        %1047 = vmatprep.subr.mxu0 0.0
        %1048 = vmatpush1.msra.mxu0 0.0
        %1049 = vmatprep.subr.mxu0 0.0
        %1050 = vmatpush1.msra.mxu0 0.0
        %1051 = vmatprep.subr.mxu0 0.0
        %1052 = vmatpush1.msra.mxu0 0.0
        %1053 = vmatprep.subr.mxu0 0.0
        %1054 = vmatpush1.msra.mxu0 0.0
        %1055 = vmatprep.subr.mxu0 0.0
        %1056 = vmatpush1.msra.mxu0 0.0
        %1057 = vmatprep.subr.mxu0 0.0
        %1058 = vmatpush1.msra.mxu0 0.0
        %1059 = vmatprep.subr.mxu0 0.0
        %1060 = vmatpush1.msra.mxu0 0.0
        %1061 = vmatprep.subr.mxu0 0.0
        %1062 = vmatpush1.msra.mxu0 0.0
        %1063 = vmatprep.subr.mxu0 0.0
        %1064 = vmatpush1.msra.mxu0 0.0
        %1065 = vmatprep.subr.mxu0 0.0
        %1066 = vmatpush1.msra.mxu0 0.0
        %1067 = vmatprep.subr.mxu0 0.0
        %1068 = vmatpush1.msra.mxu0 0.0
        %1069 = vmatprep.subr.mxu0 0.0
        %1070 = vmatpush1.msra.mxu0 0.0
        %1071 = vmatprep.subr.mxu0 0.0
        %1072 = vmatpush1.msra.mxu0 0.0
        %1073 = vmatprep.subr.mxu0 0.0
        %1074 = vmatpush1.msra.mxu0 0.0
        %1075 = vmatprep.subr.mxu0 0.0
        %1076 = vmatpush1.msra.mxu0 0.0
        %1077 = vmatprep.subr.mxu0 0.0
        %1078 = vmatpush1.msra.mxu0 0.0
        %1079 = vmatprep.subr.mxu0 0.0
        %1080 = vmatpush1.msra.mxu0 0.0
        %1081 = vmatprep.subr.mxu0 0.0
        %1082 = vmatpush1.msra.mxu0 0.0
        %1083 = vmatprep.subr.mxu0 0.0
        %1084 = vmatpush1.msra.mxu0 0.0
        %1085 = vmatprep.subr.mxu0 0.0
        %1086 = vmatpush1.msra.mxu0 0.0
        %1087 = vmatprep.subr.mxu0 0.0
        %1088 = vmatpush1.msra.mxu0 0.0
        %1089 = vmatprep.subr.mxu0 0.0
        %1090 = vmatpush1.msra.mxu0 0.0
        %1091 = vmatprep.subr.mxu0 0.0
        %1092 = vmatpush1.msra.mxu0 0.0
        %1093 = vmatprep.subr.mxu0 0.0
        %1094 = vmatpush1.msra.mxu0 0.0
        %1095 = vmatprep.subr.mxu0 0.0
        %1096 = vmatpush1.msra.mxu0 0.0
        %1097 = vmatprep.mubr.f32.mxu0 0.0
        %1098 = vmatmul.mubr.f32.gmra.mrb[0].mxu0 %v1031
        %v1099 = vpop.f32.mrb[0].mxu0
        %v1100 = vadd.f32 %v1027, %v1099
        %v1101 = vpop.f32.mrb[0].mxu0
        %1102 = vdwg.mxu0
        %v1103 = vmax.f32 %v1100, 0.0
        %v1104 = vld [vmem:[%s613] sm:$0xff]
        %v1105 = vld [vmem:[%s622] sm:$0xff]
        %1107 = vset.pattern.permute.xlu0 0
        %1108 = vperm.xlu0 %1107, %v1105
        %v1109 = vpop.permute.xlu0 %1108
        %vm1111 = vcmask 31744
        %v1113 = vsel %vm1111, %v1104, 0
        %vm1115 = vcmask 1043456
        %v1117 = vsel %vm1115, %v1103, 0
        %1119 = vmatprep.subr.mxu0 0.0
        %1120 = vmatpush1.msra.mxu0 %v1117
        %1121 = vmatprep.subr.mxu0 0.0
        %1122 = vmatpush1.msra.mxu0 0.0
        %1123 = vmatprep.subr.mxu0 0.0
        %1124 = vmatpush1.msra.mxu0 0.0
        %1125 = vmatprep.subr.mxu0 0.0
        %1126 = vmatpush1.msra.mxu0 0.0
        %1127 = vmatprep.subr.mxu0 0.0
        %1128 = vmatpush1.msra.mxu0 0.0
        %1129 = vmatprep.subr.mxu0 0.0
        %1130 = vmatpush1.msra.mxu0 0.0
        %1131 = vmatprep.subr.mxu0 0.0
        %1132 = vmatpush1.msra.mxu0 0.0
        %1133 = vmatprep.subr.mxu0 0.0
        %1134 = vmatpush1.msra.mxu0 0.0
        %1135 = vmatprep.subr.mxu0 0.0
        %1136 = vmatpush1.msra.mxu0 0.0
        %1137 = vmatprep.subr.mxu0 0.0
        %1138 = vmatpush1.msra.mxu0 0.0
        %1139 = vmatprep.subr.mxu0 0.0
        %1140 = vmatpush1.msra.mxu0 0.0
        %1141 = vmatprep.subr.mxu0 0.0
        %1142 = vmatpush1.msra.mxu0 0.0
        %1143 = vmatprep.subr.mxu0 0.0
        %1144 = vmatpush1.msra.mxu0 0.0
        %1145 = vmatprep.subr.mxu0 0.0
        %1146 = vmatpush1.msra.mxu0 0.0
        %1147 = vmatprep.subr.mxu0 0.0
        %1148 = vmatpush1.msra.mxu0 0.0
        %1149 = vmatprep.subr.mxu0 0.0
        %1150 = vmatpush1.msra.mxu0 0.0
        %1151 = vmatprep.subr.mxu0 0.0
        %1152 = vmatpush1.msra.mxu0 0.0
        %1153 = vmatprep.subr.mxu0 0.0
        %1154 = vmatpush1.msra.mxu0 0.0
        %1155 = vmatprep.subr.mxu0 0.0
        %1156 = vmatpush1.msra.mxu0 0.0
        %1157 = vmatprep.subr.mxu0 0.0
        %1158 = vmatpush1.msra.mxu0 0.0
        %1159 = vmatprep.subr.mxu0 0.0
        %1160 = vmatpush1.msra.mxu0 0.0
        %1161 = vmatprep.subr.mxu0 0.0
        %1162 = vmatpush1.msra.mxu0 0.0
        %1163 = vmatprep.subr.mxu0 0.0
        %1164 = vmatpush1.msra.mxu0 0.0
        %1165 = vmatprep.subr.mxu0 0.0
        %1166 = vmatpush1.msra.mxu0 0.0
        %1167 = vmatprep.subr.mxu0 0.0
        %1168 = vmatpush1.msra.mxu0 0.0
        %1169 = vmatprep.subr.mxu0 0.0
        %1170 = vmatpush1.msra.mxu0 0.0
        %1171 = vmatprep.subr.mxu0 0.0
        %1172 = vmatpush1.msra.mxu0 0.0
        %1173 = vmatprep.subr.mxu0 0.0
        %1174 = vmatpush1.msra.mxu0 0.0
        %1175 = vmatprep.subr.mxu0 0.0
        %1176 = vmatpush1.msra.mxu0 0.0
        %1177 = vmatprep.subr.mxu0 0.0
        %1178 = vmatpush1.msra.mxu0 0.0
        %1179 = vmatprep.subr.mxu0 0.0
        %1180 = vmatpush1.msra.mxu0 0.0
        %1181 = vmatprep.subr.mxu0 0.0
        %1182 = vmatpush1.msra.mxu0 0.0
        %1183 = vmatprep.mubr.f32.mxu0 0.0
        %1184 = vmatmul.mubr.f32.gmra.mrb[0].mxu0 %v1113
        %v1185 = vpop.f32.mrb[0].mxu0
        %v1186 = vadd.f32 %v1109, %v1185
        %v1187 = vpop.f32.mrb[0].mxu0
        %1188 = vdwg.mxu0
        %v1189 = vxor.u32 %v1186, 2147483648
        %v1190 = vmul.f32 %v1189, 1.442695
        %v1191 = vpow.pop %v1190
        %v1192 = vadd.f32 %v1191, 1.0
        %v1193 = vrcp.pop %v1192
        %v1194 = vmul.f32 1.0, %v1193
        %v1195 = vmul.f32 %v1194, 1.442695
        %v1196 = vpow.pop %v1195
        %v1197 = vld [vmem:[#allocation21] sm:$0xff]
        %v1199 = vsel %vm1029, %v1197, 0
        %1201 = vmatprep.subr.mxu0 0.0
        %1202 = vmatpush1.msra.mxu0 %v1196
        %1203 = vmatprep.subr.mxu0 0.0
        %1204 = vmatpush1.msra.mxu0 0.0
        %1205 = vmatprep.subr.mxu0 0.0
        %1206 = vmatpush1.msra.mxu0 0.0
        %1207 = vmatprep.subr.mxu0 0.0
        %1208 = vmatpush1.msra.mxu0 0.0
        %1209 = vmatprep.subr.mxu0 0.0
        %1210 = vmatpush1.msra.mxu0 0.0
        %1211 = vmatprep.subr.mxu0 0.0
        %1212 = vmatpush1.msra.mxu0 0.0
        %1213 = vmatprep.subr.mxu0 0.0
        %1214 = vmatpush1.msra.mxu0 0.0
        %1215 = vmatprep.subr.mxu0 0.0
        %1216 = vmatpush1.msra.mxu0 0.0
        %1217 = vmatprep.subr.mxu0 0.0
        %1218 = vmatpush1.msra.mxu0 0.0
        %1219 = vmatprep.subr.mxu0 0.0
        %1220 = vmatpush1.msra.mxu0 0.0
        %1221 = vmatprep.subr.mxu0 0.0
        %1222 = vmatpush1.msra.mxu0 0.0
        %1223 = vmatprep.subr.mxu0 0.0
        %1224 = vmatpush1.msra.mxu0 0.0
        %1225 = vmatprep.subr.mxu0 0.0
        %1226 = vmatpush1.msra.mxu0 0.0
        %1227 = vmatprep.subr.mxu0 0.0
        %1228 = vmatpush1.msra.mxu0 0.0
        %1229 = vmatprep.subr.mxu0 0.0
        %1230 = vmatpush1.msra.mxu0 0.0
        %1231 = vmatprep.subr.mxu0 0.0
        %1232 = vmatpush1.msra.mxu0 0.0
        %1233 = vmatprep.subr.mxu0 0.0
        %1234 = vmatpush1.msra.mxu0 0.0
        %1235 = vmatprep.subr.mxu0 0.0
        %1236 = vmatpush1.msra.mxu0 0.0
        %1237 = vmatprep.subr.mxu0 0.0
        %1238 = vmatpush1.msra.mxu0 0.0
        %1239 = vmatprep.subr.mxu0 0.0
        %1240 = vmatpush1.msra.mxu0 0.0
        %1241 = vmatprep.subr.mxu0 0.0
        %1242 = vmatpush1.msra.mxu0 0.0
        %1243 = vmatprep.subr.mxu0 0.0
        %1244 = vmatpush1.msra.mxu0 0.0
        %1245 = vmatprep.subr.mxu0 0.0
        %1246 = vmatpush1.msra.mxu0 0.0
        %1247 = vmatprep.subr.mxu0 0.0
        %1248 = vmatpush1.msra.mxu0 0.0
        %1249 = vmatprep.subr.mxu0 0.0
        %1250 = vmatpush1.msra.mxu0 0.0
        %1251 = vmatprep.subr.mxu0 0.0
        %1252 = vmatpush1.msra.mxu0 0.0
        %1253 = vmatprep.subr.mxu0 0.0
        %1254 = vmatpush1.msra.mxu0 0.0
        %1255 = vmatprep.subr.mxu0 0.0
        %1256 = vmatpush1.msra.mxu0 0.0
        %1257 = vmatprep.subr.mxu0 0.0
        %1258 = vmatpush1.msra.mxu0 0.0
        %1259 = vmatprep.subr.mxu0 0.0
        %1260 = vmatpush1.msra.mxu0 0.0
        %1261 = vmatprep.subr.mxu0 0.0
        %1262 = vmatpush1.msra.mxu0 0.0
        %1263 = vmatprep.subr.mxu0 0.0
        %1264 = vmatpush1.msra.mxu0 0.0
        %1265 = vmatprep.mubr.f32.mxu0 0.0
        %1266 = vmatmul.mubr.f32.gmra.mrb[0].mxu0 %v1199
        %v1267 = vpop.f32.mrb[0].mxu0
        %v1268 = vadd.f32 0.0, %v1267
        %v1269 = vpop.f32.mrb[0].mxu0
        %1270 = vdwg.mxu0
        %v1271 = vrcp.pop %v1268
        %v1272 = vmul.f32 %v1196, %v1271
        %v1273 = vld [vmem:[#allocation19] sm:$0xf]
        %v1276 = vunpack.c.l.s4 1983009808
        %v1277 = vunpack.c.0.s8 %v1276
        %v1278 = vlaneseq
        %v1279 = vshrl.u32 %v1278, 7
        %v1280 = vsub.s32 %v1277, %v1279
        %v1281 = vrot.slane %v1273, %v1280
        %v1282 = vcombine.high %v1281, %v1281
        %v1284 = vsel %vm768, %v1272, 0
        %vm1286 = vcmask 1041408
        %v1287 = vsel %vm1286, %v1281, 0
        %v1289 = vsel %vm1286, %v1282, 0
        %1291 = vmatprep.subr.mxu0 %v1289
        %1292 = vmatpush1.msra.mxu0 %v1287
        %1293 = vmatprep.subr.mxu0 0.0
        %1294 = vmatpush1.msra.mxu0 0.0
        %1295 = vmatprep.subr.mxu0 0.0
        %1296 = vmatpush1.msra.mxu0 0.0
        %1297 = vmatprep.subr.mxu0 0.0
        %1298 = vmatpush1.msra.mxu0 0.0
        %1299 = vmatprep.subr.mxu0 0.0
        %1300 = vmatpush1.msra.mxu0 0.0
        %1301 = vmatprep.subr.mxu0 0.0
        %1302 = vmatpush1.msra.mxu0 0.0
        %1303 = vmatprep.subr.mxu0 0.0
        %1304 = vmatpush1.msra.mxu0 0.0
        %1305 = vmatprep.subr.mxu0 0.0
        %1306 = vmatpush1.msra.mxu0 0.0
        %1307 = vmatprep.subr.mxu0 0.0
        %1308 = vmatpush1.msra.mxu0 0.0
        %1309 = vmatprep.subr.mxu0 0.0
        %1310 = vmatpush1.msra.mxu0 0.0
        %1311 = vmatprep.subr.mxu0 0.0
        %1312 = vmatpush1.msra.mxu0 0.0
        %1313 = vmatprep.subr.mxu0 0.0
        %1314 = vmatpush1.msra.mxu0 0.0
        %1315 = vmatprep.subr.mxu0 0.0
        %1316 = vmatpush1.msra.mxu0 0.0
        %1317 = vmatprep.subr.mxu0 0.0
        %1318 = vmatpush1.msra.mxu0 0.0
        %1319 = vmatprep.subr.mxu0 0.0
        %1320 = vmatpush1.msra.mxu0 0.0
        %1321 = vmatprep.subr.mxu0 0.0
        %1322 = vmatpush1.msra.mxu0 0.0
        %1323 = vmatprep.subr.mxu0 0.0
        %1324 = vmatpush1.msra.mxu0 0.0
        %1325 = vmatprep.subr.mxu0 0.0
        %1326 = vmatpush1.msra.mxu0 0.0
        %1327 = vmatprep.subr.mxu0 0.0
        %1328 = vmatpush1.msra.mxu0 0.0
        %1329 = vmatprep.subr.mxu0 0.0
        %1330 = vmatpush1.msra.mxu0 0.0
        %1331 = vmatprep.subr.mxu0 0.0
        %1332 = vmatpush1.msra.mxu0 0.0
        %1333 = vmatprep.subr.mxu0 0.0
        %1334 = vmatpush1.msra.mxu0 0.0
        %1335 = vmatprep.subr.mxu0 0.0
        %1336 = vmatpush1.msra.mxu0 0.0
        %1337 = vmatprep.subr.mxu0 0.0
        %1338 = vmatpush1.msra.mxu0 0.0
        %1339 = vmatprep.subr.mxu0 0.0
        %1340 = vmatpush1.msra.mxu0 0.0
        %1341 = vmatprep.subr.mxu0 0.0
        %1342 = vmatpush1.msra.mxu0 0.0
        %1343 = vmatprep.subr.mxu0 0.0
        %1344 = vmatpush1.msra.mxu0 0.0
        %1345 = vmatprep.subr.mxu0 0.0
        %1346 = vmatpush1.msra.mxu0 0.0
        %1347 = vmatprep.subr.mxu0 0.0
        %1348 = vmatpush1.msra.mxu0 0.0
        %1349 = vmatprep.subr.mxu0 0.0
        %1350 = vmatpush1.msra.mxu0 0.0
        %1351 = vmatprep.subr.mxu0 0.0
        %1352 = vmatpush1.msra.mxu0 0.0
        %1353 = vmatprep.subr.mxu0 0.0
        %1354 = vmatpush1.msra.mxu0 0.0
        %1355 = vmatprep.mubr.f32.mxu0 0.0
        %1356 = vmatmul.mubr.f32.gmra.mrb[0].mxu0 %v1284
        %v1357 = vpop.f32.mrb[0].mxu0
        %v1358 = vadd.f32 0.0, %v1357
        %v1359 = vpop.f32.mrb[0].mxu0
        %v1360 = vadd.f32 0.0, %v1359
        %1361 = vdwg.mxu0
        %v1362 = vmul.f32 %v916, %v1358
        %v1363 = vmul.f32 %v918, %v1360
        %v1364 = vmax.f32 %v1362, 0.0
        %v1365 = vmax.f32 %v1363, 0.0
        %1366 = vmatprep.subr.mxu0 0.0
        %1367 = vmatpush1.msra.mxu0 %v920
        %1368 = vmatprep.subr.mxu0 0.0
        %1369 = vmatpush1.msra.mxu0 %v921
        %1370 = vmatprep.subr.mxu0 0.0
        %1371 = vmatpush1.msra.mxu0 %v922
        %1372 = vmatprep.subr.mxu0 0.0
        %1373 = vmatpush1.msra.mxu0 %v923
        %1374 = vmatprep.subr.mxu0 0.0
        %1375 = vmatpush1.msra.mxu0 %v924
        %1376 = vmatprep.subr.mxu0 0.0
        %1377 = vmatpush1.msra.mxu0 %v925
        %1378 = vmatprep.subr.mxu0 0.0
        %1379 = vmatpush1.msra.mxu0 %v926
        %1380 = vmatprep.subr.mxu0 0.0
        %1381 = vmatpush1.msra.mxu0 %v927
        %1382 = vmatprep.subr.mxu0 0.0
        %1383 = vmatpush1.msra.mxu0 %v928
        %1384 = vmatprep.subr.mxu0 0.0
        %1385 = vmatpush1.msra.mxu0 %v929
        %1386 = vmatprep.subr.mxu0 0.0
        %1387 = vmatpush1.msra.mxu0 %v930
        %1388 = vmatprep.subr.mxu0 0.0
        %1389 = vmatpush1.msra.mxu0 %v931
        %1390 = vmatprep.subr.mxu0 0.0
        %1391 = vmatpush1.msra.mxu0 %v932
        %1392 = vmatprep.subr.mxu0 0.0
        %1393 = vmatpush1.msra.mxu0 %v933
        %1394 = vmatprep.subr.mxu0 0.0
        %1395 = vmatpush1.msra.mxu0 %v934
        %1396 = vmatprep.subr.mxu0 0.0
        %1397 = vmatpush1.msra.mxu0 %v935
        %1398 = vmatprep.subr.mxu0 0.0
        %1399 = vmatpush1.msra.mxu0 %v936
        %1400 = vmatprep.subr.mxu0 0.0
        %1401 = vmatpush1.msra.mxu0 %v937
        %1402 = vmatprep.subr.mxu0 0.0
        %1403 = vmatpush1.msra.mxu0 %v938
        %1404 = vmatprep.subr.mxu0 0.0
        %1405 = vmatpush1.msra.mxu0 %v939
        %1406 = vmatprep.subr.mxu0 0.0
        %1407 = vmatpush1.msra.mxu0 %v940
        %1408 = vmatprep.subr.mxu0 0.0
        %1409 = vmatpush1.msra.mxu0 %v941
        %1410 = vmatprep.subr.mxu0 0.0
        %1411 = vmatpush1.msra.mxu0 %v942
        %1412 = vmatprep.subr.mxu0 0.0
        %1413 = vmatpush1.msra.mxu0 %v943
        %1414 = vmatprep.subr.mxu0 0.0
        %1415 = vmatpush1.msra.mxu0 %v944
        %1416 = vmatprep.subr.mxu0 0.0
        %1417 = vmatpush1.msra.mxu0 %v945
        %1418 = vmatprep.subr.mxu0 0.0
        %1419 = vmatpush1.msra.mxu0 %v946
        %1420 = vmatprep.subr.mxu0 0.0
        %1421 = vmatpush1.msra.mxu0 %v947
        %1422 = vmatprep.subr.mxu0 0.0
        %1423 = vmatpush1.msra.mxu0 %v948
        %1424 = vmatprep.subr.mxu0 0.0
        %1425 = vmatpush1.msra.mxu0 %v949
        %1426 = vmatprep.subr.mxu0 0.0
        %1427 = vmatpush1.msra.mxu0 %v950
        %1428 = vmatprep.subr.mxu0 0.0
        %1429 = vmatpush1.msra.mxu0 %v951
        %1430 = vmatprep.mubr.f32.mxu0 %v1365
        %1431 = vmatmul.mubr.f32.gmra.mrb[0].mxu0 %v1364
        %v1432 = vpop.f32.mrb[0].mxu0
        %v1433 = vadd.f32 0.0, %v1432
        %v1434 = vpop.f32.mrb[0].mxu0
        %1435 = vdwg.mxu0
        %v1436 = vsel %vm768, %v1433, 0.0
        %1437 = vadd.xlane.f32.xlu0 %v1436
        %v1438 = vpop.xlane.xlu0 %1437
        %v1439 = vmul.f32 %v1438, 0.5
        %v1440 = vmul.f32 %v1364, %v1364
        %v1441 = vmul.f32 %v1365, %v1365
        %1442 = vmatprep.subr.mxu0 0.0
        %1443 = vmatpush1.msra.mxu0 %v920
        %1444 = vmatprep.subr.mxu0 0.0
        %1445 = vmatpush1.msra.mxu0 %v921
        %1446 = vmatprep.subr.mxu0 0.0
        %1447 = vmatpush1.msra.mxu0 %v922
        %1448 = vmatprep.subr.mxu0 0.0
        %1449 = vmatpush1.msra.mxu0 %v923
        %1450 = vmatprep.subr.mxu0 0.0
        %1451 = vmatpush1.msra.mxu0 %v924
        %1452 = vmatprep.subr.mxu0 0.0
        %1453 = vmatpush1.msra.mxu0 %v925
        %1454 = vmatprep.subr.mxu0 0.0
        %1455 = vmatpush1.msra.mxu0 %v926
        %1456 = vmatprep.subr.mxu0 0.0
        %1457 = vmatpush1.msra.mxu0 %v927
        %1458 = vmatprep.subr.mxu0 0.0
        %1459 = vmatpush1.msra.mxu0 %v928
        %1460 = vmatprep.subr.mxu0 0.0
        %1461 = vmatpush1.msra.mxu0 %v929
        %1462 = vmatprep.subr.mxu0 0.0
        %1463 = vmatpush1.msra.mxu0 %v930
        %1464 = vmatprep.subr.mxu0 0.0
        %1465 = vmatpush1.msra.mxu0 %v931
        %1466 = vmatprep.subr.mxu0 0.0
        %1467 = vmatpush1.msra.mxu0 %v932
        %1468 = vmatprep.subr.mxu0 0.0
        %1469 = vmatpush1.msra.mxu0 %v933
        %1470 = vmatprep.subr.mxu0 0.0
        %1471 = vmatpush1.msra.mxu0 %v934
        %1472 = vmatprep.subr.mxu0 0.0
        %1473 = vmatpush1.msra.mxu0 %v935
        %1474 = vmatprep.subr.mxu0 0.0
        %1475 = vmatpush1.msra.mxu0 %v936
        %1476 = vmatprep.subr.mxu0 0.0
        %1477 = vmatpush1.msra.mxu0 %v937
        %1478 = vmatprep.subr.mxu0 0.0
        %1479 = vmatpush1.msra.mxu0 %v938
        %1480 = vmatprep.subr.mxu0 0.0
        %1481 = vmatpush1.msra.mxu0 %v939
        %1482 = vmatprep.subr.mxu0 0.0
        %1483 = vmatpush1.msra.mxu0 %v940
        %1484 = vmatprep.subr.mxu0 0.0
        %1485 = vmatpush1.msra.mxu0 %v941
        %1486 = vmatprep.subr.mxu0 0.0
        %1487 = vmatpush1.msra.mxu0 %v942
        %1488 = vmatprep.subr.mxu0 0.0
        %1489 = vmatpush1.msra.mxu0 %v943
        %1490 = vmatprep.subr.mxu0 0.0
        %1491 = vmatpush1.msra.mxu0 %v944
        %1492 = vmatprep.subr.mxu0 0.0
        %1493 = vmatpush1.msra.mxu0 %v945
        %1494 = vmatprep.subr.mxu0 0.0
        %1495 = vmatpush1.msra.mxu0 %v946
        %1496 = vmatprep.subr.mxu0 0.0
        %1497 = vmatpush1.msra.mxu0 %v947
        %1498 = vmatprep.subr.mxu0 0.0
        %1499 = vmatpush1.msra.mxu0 %v948
        %1500 = vmatprep.subr.mxu0 0.0
        %1501 = vmatpush1.msra.mxu0 %v949
        %1502 = vmatprep.subr.mxu0 0.0
        %1503 = vmatpush1.msra.mxu0 %v950
        %1504 = vmatprep.subr.mxu0 0.0
        %1505 = vmatpush1.msra.mxu0 %v951
        %1506 = vmatprep.mubr.f32.mxu0 %v1441
        %1507 = vmatmul.mubr.f32.gmra.mrb[0].mxu0 %v1440
        %v1508 = vpop.f32.mrb[0].mxu0
        %v1509 = vadd.f32 0.0, %v1508
        %v1510 = vpop.f32.mrb[0].mxu0
        %1511 = vdwg.mxu0
        %v1512 = vsel %vm768, %v1509, 0.0
        %1513 = vadd.xlane.f32.xlu0 %v1512
        %v1514 = vpop.xlane.xlu0 %1513
        %v1515 = vmul.f32 %v1514, 0.5
        %v1516 = vmul.f32 %v1439, %v1439
        %v1517 = vsub.f32 %v1515, %v1516
        %v1518 = vmax.f32 %v1517, 0.0
        %v1519 = vadd.f32 %v1518, 1e-05
        %v1520 = vrsqrt.pop %v1519
        %v1521 = vld [vmem:[%s631] sm:$0xff]
        %v1522 = vmul.f32 %v1520, %v1521
        %v1523 = vld [vmem:[%s640] sm:$0xff]
        %v1524 = vmul.f32 %v1439, %v1522
        %v1525 = vsub.f32 %v1523, %v1524
        %1527 = vset.pattern.permute.xlu0 0
        %1528 = vperm.xlu0 %1527, %v1522
        %v1529 = vpop.permute.xlu0 %1528
        %v1531 = vmul.f32 %v1364, %v1529
        %v1532 = vmul.f32 %v1365, %v1529
        %1534 = vset.pattern.permute.xlu0 0
        %1535 = vperm.xlu0 %1534, %v1525
        %v1536 = vpop.permute.xlu0 %1535
        %v1538 = vadd.f32 %v1531, %v1536
        %v1539 = vadd.f32 %v1532, %v1536
        %v1540 = vld [vmem:[#allocation22] sm:$0x3]
        %v1542 = vlaneseq
        %v1543 = vshrl.u32 %v1542, 7
        %v1544 = vsub.s32 0, %v1543
        %v1545 = vrot.slane %v1540, %v1544
        %v1546 = vlaneseq
        %v1547 = vshrl.u32 %v1546, 7
        %v1548 = vsub.s32 1, %v1547
        %v1549 = vrot.slane %v1540, %v1548
        %v1552 = vmul.f32 %v1538, %v1545
        %v1553 = vmul.f32 %v1539, %v1549
        %1554 = vst [vmem:[#allocation2] sm:$0xff] %v1552
        %1555 = vst [vmem:[#allocation2 + $0x8] sm:$0xff] %v1553
        %1556 = vst [vmem:[%s731] sm:$0xff] %v1552
        %1557 = vst [vmem:[%s731 + $0x8] sm:$0xff] %v1553
        %s1558 = sand.u32 %s343, 1
        %s1559 = scalar_lea.sflag [#allocation6], %s1558
        %s1560 = sand.u32 %s343, 1
        %s1561 = smul.addr %s1560, 16
        %s1562 = scalar_lea.vmem [#allocation24], %s1561
        // Predicated region
        $region125: #{tpu_custom_call.1} parent=67 // pred_check
          %p1563 = pneg %p353
        $region126: #{tpu_custom_call.1} parent=67 // pred_check_branch
          %1565 = sbr.rel (%p1563) target = $region128
        $region127: #{tpu_custom_call.1} parent=67 // pred_region
          %s1567 = ssub.s32 256, 256
          %1568 = vsyncadd %s1559, %s1567
          %s1569 = smul.addr %s43, 2
          %s1570 = smul.addr %s1569, 128
          %s1571 = scalar_lea.hbm %s12, %s1570
          %s1573 = sshll.u32 %s1562, 4
          %s1574 = int_to_ptr.vmem [resolvable:$true] %s1573
          %1576 = dma.vmem_to_hbm [thread:$0]  %s1574, 256, %s1571, %s1559
        $region128: #{tpu_custom_call.1} parent=67 // pred_fallthru
          _
      $region68: #{tpu_custom_call.1} parent=5 // pred_fallthru
        _
      %p1577 = scmp.le.s32.totalorder 2, %s38
      // Predicated region
      $region129: #{tpu_custom_call.1} parent=5 // pred_check
        %p1578 = pneg %p1577
      $region130: #{tpu_custom_call.1} parent=5 // pred_check_branch
        %1580 = sbr.rel (%p1578) target = $region132
      $region131: #{tpu_custom_call.1} parent=5 // pred_region
        %s1581 = ssub.s32 %s38, 2
        // Predicated region
        $region133: #{tpu_custom_call.1} parent=131 // pred_check
          %p1582 = pneg %p359
        $region134: #{tpu_custom_call.1} parent=131 // pred_check_branch
          %1584 = sbr.rel (%p1582) target = $region136
        $region135: #{tpu_custom_call.1} parent=131 // pred_region
          %s1585 = sand.u32 %s344, 1
          %s1586 = scalar_lea.sflag [#allocation6], %s1585
          %s1587 = sand.u32 %s344, 1
          %s1588 = smul.addr %s1587, 16
          %s1589 = scalar_lea.vmem [#allocation24], %s1588
          %1590 = dma.done %s1586, 256
        $region136: #{tpu_custom_call.1} parent=131 // pred_fallthru
          _
      $region132: #{tpu_custom_call.1} parent=5 // pred_fallthru
        _
    $region6: #{tpu_custom_call.1} parent=1 // loop_footer
      %s42 = sadd.s32 1, %s38
    $region7: #{tpu_custom_call.1} parent=1 // loop_footer_branch
      %37 = sbr.rel target = $region3
    $region8: #{tpu_custom_call.1} parent=1 // loop_exit
      _
    %1591 = vsyncpa [#allocation5], 1
    %s1592 = scalar_lea.sflag [#allocation5], 1
    %1593 = vsyncpa %s1592, 1
    %1594 = vsyncpa [#allocation8], 1
    %s1595 = scalar_lea.sflag [#allocation8], 1
    %1596 = vsyncpa %s1595, 1
    %1597 = vsyncpa [#allocation11], 1
    %s1598 = scalar_lea.sflag [#allocation11], 1
    %1599 = vsyncpa %s1598, 1
    %1600 = vsyncpa [#allocation14], 1
    %s1601 = scalar_lea.sflag [#allocation14], 1
    %1602 = vsyncpa %s1601, 1
    %1603 = vsyncpa [#allocation17], 1
    %s1604 = scalar_lea.sflag [#allocation17], 1
    %1605 = vsyncpa %s1604, 1
    %1606 = vsyncpa [#allocation20], 1
    %1607 = vsyncpa [#allocation23], 1
    %1608 = vsyncpa [#allocation6], 1
    %s1609 = scalar_lea.sflag [#allocation6], 1
    %1610 = vsyncpa %s1609, 1

</llo_original>
